<compile_context>
chip_gen: v6e
topology: v6e:2x2x1
jax: 0.10.0
libtpu: 0.0.40
codegen_flags: <defaults>
</compile_context>

<pallas_src>
import functools

import jax
import jax.numpy as jnp
from jax.experimental import pallas as pl
from jax.experimental.pallas import tpu as pltpu

QSCALE = 0.02
QMIN, QMAX = -128.0, 127.0


# ----------------------------------------------------------------- fused kernel
def fused_mobilenet_kernel(
    x_ref,        # (1, Cin_p, L)  f32   one batch block: channels-as-rows, pixels-in-lanes
    mask_ref,     # (9, L)         f32   per-tap validity masks (3x3 conv, padding=1)
    w_stem_ref,   # (9, C1, Cin_p) bf16  stem weights, tap-major
    b_stem_ref,   # (C1, 1)        f32
    w_dw_ref,     # (9, C1, 1)     f32   depthwise weights, tap-major columns
    b_dw_ref,     # (C1, 1)        f32
    w_pw_ref,     # (C2, C1)       bf16
    b_pw_ref,     # (C2, 1)        f32
    w_fc_ref,     # (C2, CP)       f32   classifier, lane-padded to CP (>=128)
    b_fc_ref,     # (1, CP)        f32
    o_ref,        # (1, B, CP)     f32   lane-padded logits for this batch block
    *, H, W, B,
):
    HW = H * W
    L = B * HW
    C1 = w_stem_ref.shape[1]

    # Static flattened lane offsets of the 3x3 taps (padding = 1).
    offs = [(ky - 1) * W + (kx - 1) for ky in range(3) for kx in range(3)]

    # ---- QuantStub: int8 fake-quant (symmetric, fixed scale, zero_point = 0) ----
    # TODO(synk): PyTorch QuantStub uses a calibrated affine scale/zero_point and int8
    # weights with re-quantization between layers; a fixed symmetric per-tensor scale
    # on the input is the emulation used here.
    x = x_ref[0]                                                    # (Cin_p, L)
    xq = jnp.clip(jnp.round(x * (1.0 / QSCALE)), QMIN, QMAX) * QSCALE

    def shifted_tap(arr, t):
        # arr[:, p + offs[t]] with zero padding at image borders:
        # XLU lane roll + precomputed edge mask (also kills cross-image wrap-around).
        off = offs[t]
        if off == 0:
            return arr
        rolled = pltpu.roll(arr, shift=(-off) % L, axis=1)
        return rolled * mask_ref[t:t + 1, :]                        # (1,L) sublane bcast

    # ---- 3x3 stem conv, padding=1: 9 accumulated MXU matmuls, pixels in lanes ----
    acc1 = jnp.zeros((C1, L), jnp.float32)
    for t in range(9):
        tap = shifted_tap(xq, t).astype(jnp.bfloat16)               # (Cin_p, L)
        acc1 = acc1 + jnp.dot(w_stem_ref[t], tap,
                              preferred_element_type=jnp.float32)   # (C1, L)
    y1 = jnp.clip(acc1 + b_stem_ref[...], 0.0, 6.0)                 # ReLU6

    # ---- 3x3 depthwise conv, padding=1: lane rolls + masks, f32 on the VPU ----
    acc2 = y1 * w_dw_ref[4]                                         # center tap (off=0)
    for t in range(9):
        if t == 4:
            continue
        acc2 = acc2 + shifted_tap(y1, t) * w_dw_ref[t]              # (C1,1) lane bcast
    y2 = jnp.clip(acc2 + b_dw_ref[...], 0.0, 6.0)                   # (C1, L)

    # ---- 1x1 pointwise conv (MXU), lane-dense output ----
    y3 = jnp.dot(w_pw_ref[...], y2.astype(jnp.bfloat16),
                 preferred_element_type=jnp.float32)                # (C2, L)
    y3 = jnp.clip(y3 + b_pw_ref[...], 0.0, 6.0)                     # ReLU6

    # ---- global average pool + FC classifier (per image of the batch block) ----
    wfc = w_fc_ref[...]                                             # (C2, CP)
    bfc = b_fc_ref[...]                                             # (1, CP)
    inv_hw = 1.0 / HW
    for b in range(B):                                              # B is small & static
        pooled = jnp.sum(y3[:, b * HW:(b + 1) * HW], axis=1,
                         keepdims=True) * inv_hw                    # (C2, 1)
        logits = jnp.sum(pooled * wfc, axis=0, keepdims=True) + bfc  # (1, CP) lane-dense
        o_ref[0, b:b + 1, :] = logits
    # DeQuantStub: identity on the fp32 output path.


# -------------------------------------------------------------- full forward
def quantized_mobilenet_forward(x_nchw, params, *, batch_block=None):
    N, Cin, H, W = x_nchw.shape
    HW = H * W
    C1 = params["stem_b"].shape[-1]
    C2 = params["pw_b"].shape[-1]
    num_classes = params["fc_b"].shape[-1]

    # --- batch blocking: fold B images into the lane axis (target >=256 lanes) ---
    if batch_block is None:
        batch_block = max(1, 256 // HW)
    batch_block = max(1, min(batch_block, N))
    while N % batch_block:
        batch_block -= 1
    B = batch_block
    G = N // B
    L = B * HW

    Cin_p = ((Cin + 7) // 8) * 8                      # sublane-align the K dim
    CP = ((num_classes + 127) // 128) * 128           # lane-pad classifier output

    # NCHW -> (G, Cin_p, B*H*W): channels-as-rows, batch+pixels in lanes (b-major).
    x = x_nchw.reshape(G, B, Cin, HW).transpose(0, 2, 1, 3).reshape(G, Cin, L)
    if Cin_p != Cin:
        x = jnp.pad(x, ((0, 0), (0, Cin_p - Cin), (0, 0)))

    # --- 3x3/pad=1 validity masks, one row per tap, shared by stem and depthwise ---
    q = jnp.arange(HW, dtype=jnp.int32)
    yy, xx = q // W, q % W
    mask_rows = []
    for ky in range(3):
        for kx in range(3):
            dy, dx = ky - 1, kx - 1
            valid = ((yy + dy >= 0) & (yy + dy < H)
                     & (xx + dx >= 0) & (xx + dx < W))
            mask_rows.append(valid.astype(jnp.float32))
    mask = jnp.tile(jnp.stack(mask_rows, axis=0), (1, B))            # (9, L)

    # --- weights in the channels-as-rows orientation; MXU operands in bf16 ---
    w_stem = params["stem_w"]                                         # (9, Cin, C1)
    if Cin_p != Cin:
        w_stem = jnp.pad(w_stem, ((0, 0), (0, Cin_p - Cin), (0, 0)))
    w_stem = jnp.transpose(w_stem, (0, 2, 1)).astype(jnp.bfloat16)    # (9, C1, Cin_p)
    b_stem = params["stem_b"].reshape(C1, 1)
    w_dw = params["dw_w"][..., None]                                  # (9, C1, 1)
    b_dw = params["dw_b"].reshape(C1, 1)
    w_pw = params["pw_w"].T.astype(jnp.bfloat16)                      # (C2, C1)
    b_pw = params["pw_b"].reshape(C2, 1)
    w_fc = jnp.pad(params["fc_w"], ((0, 0), (0, CP - num_classes)))   # (C2, CP)
    b_fc = jnp.pad(params["fc_b"], ((0, 0), (0, CP - num_classes)))   # (1, CP)

    def full_spec(arr):
        return pl.BlockSpec(arr.shape, lambda g, _nd=arr.ndim: (0,) * _nd)

    kern = functools.partial(fused_mobilenet_kernel, H=H, W=W, B=B)

    out = pl.pallas_call(
        kern,
        out_shape=jax.ShapeDtypeStruct((G, B, CP), jnp.float32),
        grid=(G,),
        in_specs=[
            pl.BlockSpec((1, Cin_p, L), lambda g: (g, 0, 0)),
            full_spec(mask),
            full_spec(w_stem), full_spec(b_stem),
            full_spec(w_dw), full_spec(b_dw),
            full_spec(w_pw), full_spec(b_pw),
            full_spec(w_fc), full_spec(b_fc),
        ],
        out_specs=pl.BlockSpec((1, B, CP), lambda g: (g, 0, 0)),
        compiler_params=pltpu.CompilerParams(
            dimension_semantics=("parallel",)),        # shard batch blocks on v7x TCs
    )(x, mask, w_stem, b_stem, w_dw, b_dw, w_pw, b_pw, w_fc, b_fc)

    return out.reshape(N, CP)[:, :num_classes]


def init_params(key, cin, c1, c2, num_classes):
    ks = jax.random.split(key, 8)
    return {
        "stem_w": 0.1 * jax.random.normal(ks[0], (9, cin, c1), jnp.float32),
        "stem_b": 0.1 * jax.random.normal(ks[1], (1, c1), jnp.float32),
        "dw_w":   0.1 * jax.random.normal(ks[2], (9, c1), jnp.float32),
        "dw_b":   0.1 * jax.random.normal(ks[3], (1, c1), jnp.float32),
        "pw_w":   0.1 * jax.random.normal(ks[4], (c1, c2), jnp.float32),
        "pw_b":   0.1 * jax.random.normal(ks[5], (1, c2), jnp.float32),
        "fc_w":   0.1 * jax.random.normal(ks[6], (c2, num_classes), jnp.float32),
        "fc_b":   0.1 * jax.random.normal(ks[7], (1, num_classes), jnp.float32),
    }


if __name__ == "__main__":
    key = jax.random.PRNGKey(0)
    k_x, k_p = jax.random.split(key)

    N, Cin, H, W = 2, 4, 16, 16          # PyTorch-style NCHW input
    C1, C2, NUM_CLASSES = 8, 16, 10

    x = jax.random.normal(k_x, (N, Cin, H, W), jnp.float32)
    params = init_params(k_p, Cin, C1, C2, NUM_CLASSES)

    out = quantized_mobilenet_forward(x, params)
    jax.block_until_ready(out)
    assert out.shape == (N, NUM_CLASSES)
    print("KERNEL_OK")
</pallas_src>

<mosaic_0001>
module attributes {stable_mosaic.version = 11 : i64} {
  func.func @fused_mobilenet_kernel(%arg0: i32, %arg1: memref<1x8x256xf32, #tpu.memory_space<vmem>>, %arg2: memref<9x256xf32, #tpu.memory_space<vmem>>, %arg3: memref<9x8x8xbf16, #tpu.memory_space<vmem>>, %arg4: memref<8x1xf32, #tpu.memory_space<vmem>>, %arg5: memref<9x8x1xf32, #tpu.memory_space<vmem>>, %arg6: memref<8x1xf32, #tpu.memory_space<vmem>>, %arg7: memref<16x8xbf16, #tpu.memory_space<vmem>>, %arg8: memref<16x1xf32, #tpu.memory_space<vmem>>, %arg9: memref<16x128xf32, #tpu.memory_space<vmem>>, %arg10: memref<1x128xf32, #tpu.memory_space<vmem>>, %arg11: memref<1x1x128xf32, #tpu.memory_space<vmem>>) attributes {dimension_semantics = [#tpu.dimension_semantics<parallel>], iteration_bounds = array<i64: 2>, scalar_prefetch = 0 : i64, scratch_operands = 0 : i64, tpu.core_type = #tpu.core_type<tc>, window_params = [{transform_indices = @transform_0, window_bounds = array<i64: 1, 8, 256>}, {pipeline_mode = #tpu.pipeline_mode<synchronous>, transform_indices = @transform_1, window_bounds = array<i64: 9, 256>}, {pipeline_mode = #tpu.pipeline_mode<synchronous>, transform_indices = @transform_2, window_bounds = array<i64: 9, 8, 8>}, {pipeline_mode = #tpu.pipeline_mode<synchronous>, transform_indices = @transform_3, window_bounds = array<i64: 8, 1>}, {pipeline_mode = #tpu.pipeline_mode<synchronous>, transform_indices = @transform_4, window_bounds = array<i64: 9, 8, 1>}, {pipeline_mode = #tpu.pipeline_mode<synchronous>, transform_indices = @transform_5, window_bounds = array<i64: 8, 1>}, {pipeline_mode = #tpu.pipeline_mode<synchronous>, transform_indices = @transform_6, window_bounds = array<i64: 16, 8>}, {pipeline_mode = #tpu.pipeline_mode<synchronous>, transform_indices = @transform_7, window_bounds = array<i64: 16, 1>}, {pipeline_mode = #tpu.pipeline_mode<synchronous>, transform_indices = @transform_8, window_bounds = array<i64: 16, 128>}, {pipeline_mode = #tpu.pipeline_mode<synchronous>, transform_indices = @transform_9, window_bounds = array<i64: 1, 128>}, {transform_indices = @transform_10, window_bounds = array<i64: 1, 1, 128>}]} {
    %c0 = arith.constant 0 : index
    %c0_0 = arith.constant 0 : index
    %c0_1 = arith.constant 0 : index
    %0 = vector.load %arg1[%c0, %c0_0, %c0_1] : memref<1x8x256xf32, #tpu.memory_space<vmem>>, vector<1x8x256xf32>
    %1 = vector.shape_cast %0 : vector<1x8x256xf32> to vector<8x256xf32>
    %cst = arith.constant 5.000000e+01 : f32
    %2 = vector.broadcast %cst : f32 to vector<8x256xf32>
    %3 = arith.mulf %1, %2 : vector<8x256xf32>
    %4 = math.roundeven %3 : vector<8x256xf32>
    %cst_2 = arith.constant -1.280000e+02 : f32
    %cst_3 = arith.constant 1.270000e+02 : f32
    %5 = vector.broadcast %cst_2 : f32 to vector<8x256xf32>
    %6 = arith.maximumf %5, %4 : vector<8x256xf32>
    %7 = vector.broadcast %cst_3 : f32 to vector<8x256xf32>
    %8 = arith.minimumf %7, %6 : vector<8x256xf32>
    %cst_4 = arith.constant 2.000000e-02 : f32
    %9 = vector.broadcast %cst_4 : f32 to vector<8x256xf32>
    %10 = arith.mulf %8, %9 : vector<8x256xf32>
    %cst_5 = arith.constant 0.000000e+00 : f32
    %11 = vector.broadcast %cst_5 : f32 to vector<8x256xf32>
    %c17_i32 = arith.constant 17 : i32
    %12 = tpu.dynamic_rotate %10 by %c17_i32 dim 1 : vector<8x256xf32>, i32 -> vector<8x256xf32>
    %c0_6 = arith.constant 0 : index
    %c0_7 = arith.constant 0 : index
    %13 = vector.load %arg2[%c0_6, %c0_7] : memref<9x256xf32, #tpu.memory_space<vmem>>, vector<1x256xf32>
    %14 = vector.broadcast %13 : vector<1x256xf32> to vector<8x256xf32>
    %15 = arith.mulf %12, %14 : vector<8x256xf32>
    %16 = arith.truncf %15 : vector<8x256xf32> to vector<8x256xbf16>
    %c0_8 = arith.constant 0 : index
    %c0_9 = arith.constant 0 : index
    %c0_10 = arith.constant 0 : index
    %17 = vector.load %arg3[%c0_8, %c0_9, %c0_10] : memref<9x8x8xbf16, #tpu.memory_space<vmem>>, vector<1x8x8xbf16>
    %18 = vector.shape_cast %17 : vector<1x8x8xbf16> to vector<8x8xbf16>
    %cst_11 = arith.constant dense<0.000000e+00> : vector<8x256xf32>
    %19 = tpu.matmul %18, %16, %cst_11 {dimension_numbers = #tpu.dot_dimension_numbers<[1], [0], [0], [1], [0, 0, 1, 1], [], []>} : vector<8x8xbf16>, vector<8x256xbf16>, vector<8x256xf32> -> vector<8x256xf32>
    %20 = arith.addf %11, %19 : vector<8x256xf32>
    %c16_i32 = arith.constant 16 : i32
    %21 = tpu.dynamic_rotate %10 by %c16_i32 dim 1 : vector<8x256xf32>, i32 -> vector<8x256xf32>
    %c1 = arith.constant 1 : index
    %c0_12 = arith.constant 0 : index
    %22 = vector.load %arg2[%c1, %c0_12] : memref<9x256xf32, #tpu.memory_space<vmem>>, vector<1x256xf32>
    %23 = vector.broadcast %22 : vector<1x256xf32> to vector<8x256xf32>
    %24 = arith.mulf %21, %23 : vector<8x256xf32>
    %25 = arith.truncf %24 : vector<8x256xf32> to vector<8x256xbf16>
    %c1_13 = arith.constant 1 : index
    %c0_14 = arith.constant 0 : index
    %c0_15 = arith.constant 0 : index
    %26 = vector.load %arg3[%c1_13, %c0_14, %c0_15] : memref<9x8x8xbf16, #tpu.memory_space<vmem>>, vector<1x8x8xbf16>
    %27 = vector.shape_cast %26 : vector<1x8x8xbf16> to vector<8x8xbf16>
    %cst_16 = arith.constant dense<0.000000e+00> : vector<8x256xf32>
    %28 = tpu.matmul %27, %25, %cst_16 {dimension_numbers = #tpu.dot_dimension_numbers<[1], [0], [0], [1], [0, 0, 1, 1], [], []>} : vector<8x8xbf16>, vector<8x256xbf16>, vector<8x256xf32> -> vector<8x256xf32>
    %29 = arith.addf %20, %28 : vector<8x256xf32>
    %c15_i32 = arith.constant 15 : i32
    %30 = tpu.dynamic_rotate %10 by %c15_i32 dim 1 : vector<8x256xf32>, i32 -> vector<8x256xf32>
    %c2 = arith.constant 2 : index
    %c0_17 = arith.constant 0 : index
    %31 = vector.load %arg2[%c2, %c0_17] : memref<9x256xf32, #tpu.memory_space<vmem>>, vector<1x256xf32>
    %32 = vector.broadcast %31 : vector<1x256xf32> to vector<8x256xf32>
    %33 = arith.mulf %30, %32 : vector<8x256xf32>
    %34 = arith.truncf %33 : vector<8x256xf32> to vector<8x256xbf16>
    %c2_18 = arith.constant 2 : index
    %c0_19 = arith.constant 0 : index
    %c0_20 = arith.constant 0 : index
    %35 = vector.load %arg3[%c2_18, %c0_19, %c0_20] : memref<9x8x8xbf16, #tpu.memory_space<vmem>>, vector<1x8x8xbf16>
    %36 = vector.shape_cast %35 : vector<1x8x8xbf16> to vector<8x8xbf16>
    %cst_21 = arith.constant dense<0.000000e+00> : vector<8x256xf32>
    %37 = tpu.matmul %36, %34, %cst_21 {dimension_numbers = #tpu.dot_dimension_numbers<[1], [0], [0], [1], [0, 0, 1, 1], [], []>} : vector<8x8xbf16>, vector<8x256xbf16>, vector<8x256xf32> -> vector<8x256xf32>
    %38 = arith.addf %29, %37 : vector<8x256xf32>
    %c1_i32 = arith.constant 1 : i32
    %39 = tpu.dynamic_rotate %10 by %c1_i32 dim 1 : vector<8x256xf32>, i32 -> vector<8x256xf32>
    %c3 = arith.constant 3 : index
    %c0_22 = arith.constant 0 : index
    %40 = vector.load %arg2[%c3, %c0_22] : memref<9x256xf32, #tpu.memory_space<vmem>>, vector<1x256xf32>
    %41 = vector.broadcast %40 : vector<1x256xf32> to vector<8x256xf32>
    %42 = arith.mulf %39, %41 : vector<8x256xf32>
    %43 = arith.truncf %42 : vector<8x256xf32> to vector<8x256xbf16>
    %c3_23 = arith.constant 3 : index
    %c0_24 = arith.constant 0 : index
    %c0_25 = arith.constant 0 : index
    %44 = vector.load %arg3[%c3_23, %c0_24, %c0_25] : memref<9x8x8xbf16, #tpu.memory_space<vmem>>, vector<1x8x8xbf16>
    %45 = vector.shape_cast %44 : vector<1x8x8xbf16> to vector<8x8xbf16>
    %cst_26 = arith.constant dense<0.000000e+00> : vector<8x256xf32>
    %46 = tpu.matmul %45, %43, %cst_26 {dimension_numbers = #tpu.dot_dimension_numbers<[1], [0], [0], [1], [0, 0, 1, 1], [], []>} : vector<8x8xbf16>, vector<8x256xbf16>, vector<8x256xf32> -> vector<8x256xf32>
    %47 = arith.addf %38, %46 : vector<8x256xf32>
    %48 = arith.truncf %10 : vector<8x256xf32> to vector<8x256xbf16>
    %c4 = arith.constant 4 : index
    %c0_27 = arith.constant 0 : index
    %c0_28 = arith.constant 0 : index
    %49 = vector.load %arg3[%c4, %c0_27, %c0_28] : memref<9x8x8xbf16, #tpu.memory_space<vmem>>, vector<1x8x8xbf16>
    %50 = vector.shape_cast %49 : vector<1x8x8xbf16> to vector<8x8xbf16>
    %cst_29 = arith.constant dense<0.000000e+00> : vector<8x256xf32>
    %51 = tpu.matmul %50, %48, %cst_29 {dimension_numbers = #tpu.dot_dimension_numbers<[1], [0], [0], [1], [0, 0, 1, 1], [], []>} : vector<8x8xbf16>, vector<8x256xbf16>, vector<8x256xf32> -> vector<8x256xf32>
    %52 = arith.addf %47, %51 : vector<8x256xf32>
    %c255_i32 = arith.constant 255 : i32
    %53 = tpu.dynamic_rotate %10 by %c255_i32 dim 1 : vector<8x256xf32>, i32 -> vector<8x256xf32>
    %c5 = arith.constant 5 : index
    %c0_30 = arith.constant 0 : index
    %54 = vector.load %arg2[%c5, %c0_30] : memref<9x256xf32, #tpu.memory_space<vmem>>, vector<1x256xf32>
    %55 = vector.broadcast %54 : vector<1x256xf32> to vector<8x256xf32>
    %56 = arith.mulf %53, %55 : vector<8x256xf32>
    %57 = arith.truncf %56 : vector<8x256xf32> to vector<8x256xbf16>
    %c5_31 = arith.constant 5 : index
    %c0_32 = arith.constant 0 : index
    %c0_33 = arith.constant 0 : index
    %58 = vector.load %arg3[%c5_31, %c0_32, %c0_33] : memref<9x8x8xbf16, #tpu.memory_space<vmem>>, vector<1x8x8xbf16>
    %59 = vector.shape_cast %58 : vector<1x8x8xbf16> to vector<8x8xbf16>
    %cst_34 = arith.constant dense<0.000000e+00> : vector<8x256xf32>
    %60 = tpu.matmul %59, %57, %cst_34 {dimension_numbers = #tpu.dot_dimension_numbers<[1], [0], [0], [1], [0, 0, 1, 1], [], []>} : vector<8x8xbf16>, vector<8x256xbf16>, vector<8x256xf32> -> vector<8x256xf32>
    %61 = arith.addf %52, %60 : vector<8x256xf32>
    %c241_i32 = arith.constant 241 : i32
    %62 = tpu.dynamic_rotate %10 by %c241_i32 dim 1 : vector<8x256xf32>, i32 -> vector<8x256xf32>
    %c6 = arith.constant 6 : index
    %c0_35 = arith.constant 0 : index
    %63 = vector.load %arg2[%c6, %c0_35] : memref<9x256xf32, #tpu.memory_space<vmem>>, vector<1x256xf32>
    %64 = vector.broadcast %63 : vector<1x256xf32> to vector<8x256xf32>
    %65 = arith.mulf %62, %64 : vector<8x256xf32>
    %66 = arith.truncf %65 : vector<8x256xf32> to vector<8x256xbf16>
    %c6_36 = arith.constant 6 : index
    %c0_37 = arith.constant 0 : index
    %c0_38 = arith.constant 0 : index
    %67 = vector.load %arg3[%c6_36, %c0_37, %c0_38] : memref<9x8x8xbf16, #tpu.memory_space<vmem>>, vector<1x8x8xbf16>
    %68 = vector.shape_cast %67 : vector<1x8x8xbf16> to vector<8x8xbf16>
    %cst_39 = arith.constant dense<0.000000e+00> : vector<8x256xf32>
    %69 = tpu.matmul %68, %66, %cst_39 {dimension_numbers = #tpu.dot_dimension_numbers<[1], [0], [0], [1], [0, 0, 1, 1], [], []>} : vector<8x8xbf16>, vector<8x256xbf16>, vector<8x256xf32> -> vector<8x256xf32>
    %70 = arith.addf %61, %69 : vector<8x256xf32>
    %c240_i32 = arith.constant 240 : i32
    %71 = tpu.dynamic_rotate %10 by %c240_i32 dim 1 : vector<8x256xf32>, i32 -> vector<8x256xf32>
    %c7 = arith.constant 7 : index
    %c0_40 = arith.constant 0 : index
    %72 = vector.load %arg2[%c7, %c0_40] : memref<9x256xf32, #tpu.memory_space<vmem>>, vector<1x256xf32>
    %73 = vector.broadcast %72 : vector<1x256xf32> to vector<8x256xf32>
    %74 = arith.mulf %71, %73 : vector<8x256xf32>
    %75 = arith.truncf %74 : vector<8x256xf32> to vector<8x256xbf16>
    %c7_41 = arith.constant 7 : index
    %c0_42 = arith.constant 0 : index
    %c0_43 = arith.constant 0 : index
    %76 = vector.load %arg3[%c7_41, %c0_42, %c0_43] : memref<9x8x8xbf16, #tpu.memory_space<vmem>>, vector<1x8x8xbf16>
    %77 = vector.shape_cast %76 : vector<1x8x8xbf16> to vector<8x8xbf16>
    %cst_44 = arith.constant dense<0.000000e+00> : vector<8x256xf32>
    %78 = tpu.matmul %77, %75, %cst_44 {dimension_numbers = #tpu.dot_dimension_numbers<[1], [0], [0], [1], [0, 0, 1, 1], [], []>} : vector<8x8xbf16>, vector<8x256xbf16>, vector<8x256xf32> -> vector<8x256xf32>
    %79 = arith.addf %70, %78 : vector<8x256xf32>
    %c239_i32 = arith.constant 239 : i32
    %80 = tpu.dynamic_rotate %10 by %c239_i32 dim 1 : vector<8x256xf32>, i32 -> vector<8x256xf32>
    %c8 = arith.constant 8 : index
    %c0_45 = arith.constant 0 : index
    %81 = vector.load %arg2[%c8, %c0_45] : memref<9x256xf32, #tpu.memory_space<vmem>>, vector<1x256xf32>
    %82 = vector.broadcast %81 : vector<1x256xf32> to vector<8x256xf32>
    %83 = arith.mulf %80, %82 : vector<8x256xf32>
    %84 = arith.truncf %83 : vector<8x256xf32> to vector<8x256xbf16>
    %c8_46 = arith.constant 8 : index
    %c0_47 = arith.constant 0 : index
    %c0_48 = arith.constant 0 : index
    %85 = vector.load %arg3[%c8_46, %c0_47, %c0_48] : memref<9x8x8xbf16, #tpu.memory_space<vmem>>, vector<1x8x8xbf16>
    %86 = vector.shape_cast %85 : vector<1x8x8xbf16> to vector<8x8xbf16>
    %cst_49 = arith.constant dense<0.000000e+00> : vector<8x256xf32>
    %87 = tpu.matmul %86, %84, %cst_49 {dimension_numbers = #tpu.dot_dimension_numbers<[1], [0], [0], [1], [0, 0, 1, 1], [], []>} : vector<8x8xbf16>, vector<8x256xbf16>, vector<8x256xf32> -> vector<8x256xf32>
    %88 = arith.addf %79, %87 : vector<8x256xf32>
    %c0_50 = arith.constant 0 : index
    %c0_51 = arith.constant 0 : index
    %89 = vector.load %arg4[%c0_50, %c0_51] : memref<8x1xf32, #tpu.memory_space<vmem>>, vector<8x1xf32>
    %90 = vector.broadcast %89 : vector<8x1xf32> to vector<8x256xf32>
    %91 = arith.addf %88, %90 : vector<8x256xf32>
    %cst_52 = arith.constant 0.000000e+00 : f32
    %cst_53 = arith.constant 6.000000e+00 : f32
    %92 = vector.broadcast %cst_52 : f32 to vector<8x256xf32>
    %93 = arith.maximumf %92, %91 : vector<8x256xf32>
    %94 = vector.broadcast %cst_53 : f32 to vector<8x256xf32>
    %95 = arith.minimumf %94, %93 : vector<8x256xf32>
    %c4_54 = arith.constant 4 : index
    %c0_55 = arith.constant 0 : index
    %c0_56 = arith.constant 0 : index
    %96 = vector.load %arg5[%c4_54, %c0_55, %c0_56] : memref<9x8x1xf32, #tpu.memory_space<vmem>>, vector<1x8x1xf32>
    %97 = vector.shape_cast %96 : vector<1x8x1xf32> to vector<8x1xf32>
    %98 = vector.broadcast %97 : vector<8x1xf32> to vector<8x256xf32>
    %99 = arith.mulf %95, %98 : vector<8x256xf32>
    %c17_i32_57 = arith.constant 17 : i32
    %100 = tpu.dynamic_rotate %95 by %c17_i32_57 dim 1 : vector<8x256xf32>, i32 -> vector<8x256xf32>
    %c0_58 = arith.constant 0 : index
    %c0_59 = arith.constant 0 : index
    %101 = vector.load %arg2[%c0_58, %c0_59] : memref<9x256xf32, #tpu.memory_space<vmem>>, vector<1x256xf32>
    %102 = vector.broadcast %101 : vector<1x256xf32> to vector<8x256xf32>
    %103 = arith.mulf %100, %102 : vector<8x256xf32>
    %c0_60 = arith.constant 0 : index
    %c0_61 = arith.constant 0 : index
    %c0_62 = arith.constant 0 : index
    %104 = vector.load %arg5[%c0_60, %c0_61, %c0_62] : memref<9x8x1xf32, #tpu.memory_space<vmem>>, vector<1x8x1xf32>
    %105 = vector.shape_cast %104 : vector<1x8x1xf32> to vector<8x1xf32>
    %106 = vector.broadcast %105 : vector<8x1xf32> to vector<8x256xf32>
    %107 = arith.mulf %103, %106 : vector<8x256xf32>
    %108 = arith.addf %99, %107 : vector<8x256xf32>
    %c16_i32_63 = arith.constant 16 : i32
    %109 = tpu.dynamic_rotate %95 by %c16_i32_63 dim 1 : vector<8x256xf32>, i32 -> vector<8x256xf32>
    %c1_64 = arith.constant 1 : index
    %c0_65 = arith.constant 0 : index
    %110 = vector.load %arg2[%c1_64, %c0_65] : memref<9x256xf32, #tpu.memory_space<vmem>>, vector<1x256xf32>
    %111 = vector.broadcast %110 : vector<1x256xf32> to vector<8x256xf32>
    %112 = arith.mulf %109, %111 : vector<8x256xf32>
    %c1_66 = arith.constant 1 : index
    %c0_67 = arith.constant 0 : index
    %c0_68 = arith.constant 0 : index
    %113 = vector.load %arg5[%c1_66, %c0_67, %c0_68] : memref<9x8x1xf32, #tpu.memory_space<vmem>>, vector<1x8x1xf32>
    %114 = vector.shape_cast %113 : vector<1x8x1xf32> to vector<8x1xf32>
    %115 = vector.broadcast %114 : vector<8x1xf32> to vector<8x256xf32>
    %116 = arith.mulf %112, %115 : vector<8x256xf32>
    %117 = arith.addf %108, %116 : vector<8x256xf32>
    %c15_i32_69 = arith.constant 15 : i32
    %118 = tpu.dynamic_rotate %95 by %c15_i32_69 dim 1 : vector<8x256xf32>, i32 -> vector<8x256xf32>
    %c2_70 = arith.constant 2 : index
    %c0_71 = arith.constant 0 : index
    %119 = vector.load %arg2[%c2_70, %c0_71] : memref<9x256xf32, #tpu.memory_space<vmem>>, vector<1x256xf32>
    %120 = vector.broadcast %119 : vector<1x256xf32> to vector<8x256xf32>
    %121 = arith.mulf %118, %120 : vector<8x256xf32>
    %c2_72 = arith.constant 2 : index
    %c0_73 = arith.constant 0 : index
    %c0_74 = arith.constant 0 : index
    %122 = vector.load %arg5[%c2_72, %c0_73, %c0_74] : memref<9x8x1xf32, #tpu.memory_space<vmem>>, vector<1x8x1xf32>
    %123 = vector.shape_cast %122 : vector<1x8x1xf32> to vector<8x1xf32>
    %124 = vector.broadcast %123 : vector<8x1xf32> to vector<8x256xf32>
    %125 = arith.mulf %121, %124 : vector<8x256xf32>
    %126 = arith.addf %117, %125 : vector<8x256xf32>
    %c1_i32_75 = arith.constant 1 : i32
    %127 = tpu.dynamic_rotate %95 by %c1_i32_75 dim 1 : vector<8x256xf32>, i32 -> vector<8x256xf32>
    %c3_76 = arith.constant 3 : index
    %c0_77 = arith.constant 0 : index
    %128 = vector.load %arg2[%c3_76, %c0_77] : memref<9x256xf32, #tpu.memory_space<vmem>>, vector<1x256xf32>
    %129 = vector.broadcast %128 : vector<1x256xf32> to vector<8x256xf32>
    %130 = arith.mulf %127, %129 : vector<8x256xf32>
    %c3_78 = arith.constant 3 : index
    %c0_79 = arith.constant 0 : index
    %c0_80 = arith.constant 0 : index
    %131 = vector.load %arg5[%c3_78, %c0_79, %c0_80] : memref<9x8x1xf32, #tpu.memory_space<vmem>>, vector<1x8x1xf32>
    %132 = vector.shape_cast %131 : vector<1x8x1xf32> to vector<8x1xf32>
    %133 = vector.broadcast %132 : vector<8x1xf32> to vector<8x256xf32>
    %134 = arith.mulf %130, %133 : vector<8x256xf32>
    %135 = arith.addf %126, %134 : vector<8x256xf32>
    %c255_i32_81 = arith.constant 255 : i32
    %136 = tpu.dynamic_rotate %95 by %c255_i32_81 dim 1 : vector<8x256xf32>, i32 -> vector<8x256xf32>
    %c5_82 = arith.constant 5 : index
    %c0_83 = arith.constant 0 : index
    %137 = vector.load %arg2[%c5_82, %c0_83] : memref<9x256xf32, #tpu.memory_space<vmem>>, vector<1x256xf32>
    %138 = vector.broadcast %137 : vector<1x256xf32> to vector<8x256xf32>
    %139 = arith.mulf %136, %138 : vector<8x256xf32>
    %c5_84 = arith.constant 5 : index
    %c0_85 = arith.constant 0 : index
    %c0_86 = arith.constant 0 : index
    %140 = vector.load %arg5[%c5_84, %c0_85, %c0_86] : memref<9x8x1xf32, #tpu.memory_space<vmem>>, vector<1x8x1xf32>
    %141 = vector.shape_cast %140 : vector<1x8x1xf32> to vector<8x1xf32>
    %142 = vector.broadcast %141 : vector<8x1xf32> to vector<8x256xf32>
    %143 = arith.mulf %139, %142 : vector<8x256xf32>
    %144 = arith.addf %135, %143 : vector<8x256xf32>
    %c241_i32_87 = arith.constant 241 : i32
    %145 = tpu.dynamic_rotate %95 by %c241_i32_87 dim 1 : vector<8x256xf32>, i32 -> vector<8x256xf32>
    %c6_88 = arith.constant 6 : index
    %c0_89 = arith.constant 0 : index
    %146 = vector.load %arg2[%c6_88, %c0_89] : memref<9x256xf32, #tpu.memory_space<vmem>>, vector<1x256xf32>
    %147 = vector.broadcast %146 : vector<1x256xf32> to vector<8x256xf32>
    %148 = arith.mulf %145, %147 : vector<8x256xf32>
    %c6_90 = arith.constant 6 : index
    %c0_91 = arith.constant 0 : index
    %c0_92 = arith.constant 0 : index
    %149 = vector.load %arg5[%c6_90, %c0_91, %c0_92] : memref<9x8x1xf32, #tpu.memory_space<vmem>>, vector<1x8x1xf32>
    %150 = vector.shape_cast %149 : vector<1x8x1xf32> to vector<8x1xf32>
    %151 = vector.broadcast %150 : vector<8x1xf32> to vector<8x256xf32>
    %152 = arith.mulf %148, %151 : vector<8x256xf32>
    %153 = arith.addf %144, %152 : vector<8x256xf32>
    %c240_i32_93 = arith.constant 240 : i32
    %154 = tpu.dynamic_rotate %95 by %c240_i32_93 dim 1 : vector<8x256xf32>, i32 -> vector<8x256xf32>
    %c7_94 = arith.constant 7 : index
    %c0_95 = arith.constant 0 : index
    %155 = vector.load %arg2[%c7_94, %c0_95] : memref<9x256xf32, #tpu.memory_space<vmem>>, vector<1x256xf32>
    %156 = vector.broadcast %155 : vector<1x256xf32> to vector<8x256xf32>
    %157 = arith.mulf %154, %156 : vector<8x256xf32>
    %c7_96 = arith.constant 7 : index
    %c0_97 = arith.constant 0 : index
    %c0_98 = arith.constant 0 : index
    %158 = vector.load %arg5[%c7_96, %c0_97, %c0_98] : memref<9x8x1xf32, #tpu.memory_space<vmem>>, vector<1x8x1xf32>
    %159 = vector.shape_cast %158 : vector<1x8x1xf32> to vector<8x1xf32>
    %160 = vector.broadcast %159 : vector<8x1xf32> to vector<8x256xf32>
    %161 = arith.mulf %157, %160 : vector<8x256xf32>
    %162 = arith.addf %153, %161 : vector<8x256xf32>
    %c239_i32_99 = arith.constant 239 : i32
    %163 = tpu.dynamic_rotate %95 by %c239_i32_99 dim 1 : vector<8x256xf32>, i32 -> vector<8x256xf32>
    %c8_100 = arith.constant 8 : index
    %c0_101 = arith.constant 0 : index
    %164 = vector.load %arg2[%c8_100, %c0_101] : memref<9x256xf32, #tpu.memory_space<vmem>>, vector<1x256xf32>
    %165 = vector.broadcast %164 : vector<1x256xf32> to vector<8x256xf32>
    %166 = arith.mulf %163, %165 : vector<8x256xf32>
    %c8_102 = arith.constant 8 : index
    %c0_103 = arith.constant 0 : index
    %c0_104 = arith.constant 0 : index
    %167 = vector.load %arg5[%c8_102, %c0_103, %c0_104] : memref<9x8x1xf32, #tpu.memory_space<vmem>>, vector<1x8x1xf32>
    %168 = vector.shape_cast %167 : vector<1x8x1xf32> to vector<8x1xf32>
    %169 = vector.broadcast %168 : vector<8x1xf32> to vector<8x256xf32>
    %170 = arith.mulf %166, %169 : vector<8x256xf32>
    %171 = arith.addf %162, %170 : vector<8x256xf32>
    %c0_105 = arith.constant 0 : index
    %c0_106 = arith.constant 0 : index
    %172 = vector.load %arg6[%c0_105, %c0_106] : memref<8x1xf32, #tpu.memory_space<vmem>>, vector<8x1xf32>
    %173 = vector.broadcast %172 : vector<8x1xf32> to vector<8x256xf32>
    %174 = arith.addf %171, %173 : vector<8x256xf32>
    %cst_107 = arith.constant 0.000000e+00 : f32
    %cst_108 = arith.constant 6.000000e+00 : f32
    %175 = vector.broadcast %cst_107 : f32 to vector<8x256xf32>
    %176 = arith.maximumf %175, %174 : vector<8x256xf32>
    %177 = vector.broadcast %cst_108 : f32 to vector<8x256xf32>
    %178 = arith.minimumf %177, %176 : vector<8x256xf32>
    %c0_109 = arith.constant 0 : index
    %c0_110 = arith.constant 0 : index
    %179 = vector.load %arg7[%c0_109, %c0_110] : memref<16x8xbf16, #tpu.memory_space<vmem>>, vector<16x8xbf16>
    %180 = arith.truncf %178 : vector<8x256xf32> to vector<8x256xbf16>
    %cst_111 = arith.constant dense<0.000000e+00> : vector<16x256xf32>
    %181 = tpu.matmul %179, %180, %cst_111 {dimension_numbers = #tpu.dot_dimension_numbers<[1], [0], [0], [1], [0, 0, 1, 1], [], []>} : vector<16x8xbf16>, vector<8x256xbf16>, vector<16x256xf32> -> vector<16x256xf32>
    %c0_112 = arith.constant 0 : index
    %c0_113 = arith.constant 0 : index
    %182 = vector.load %arg8[%c0_112, %c0_113] : memref<16x1xf32, #tpu.memory_space<vmem>>, vector<16x1xf32>
    %183 = vector.broadcast %182 : vector<16x1xf32> to vector<16x256xf32>
    %184 = arith.addf %181, %183 : vector<16x256xf32>
    %cst_114 = arith.constant 0.000000e+00 : f32
    %cst_115 = arith.constant 6.000000e+00 : f32
    %185 = vector.broadcast %cst_114 : f32 to vector<16x256xf32>
    %186 = arith.maximumf %185, %184 : vector<16x256xf32>
    %187 = vector.broadcast %cst_115 : f32 to vector<16x256xf32>
    %188 = arith.minimumf %187, %186 : vector<16x256xf32>
    %c0_116 = arith.constant 0 : index
    %c0_117 = arith.constant 0 : index
    %189 = vector.load %arg9[%c0_116, %c0_117] : memref<16x128xf32, #tpu.memory_space<vmem>>, vector<16x128xf32>
    %c0_118 = arith.constant 0 : index
    %c0_119 = arith.constant 0 : index
    %190 = vector.load %arg10[%c0_118, %c0_119] : memref<1x128xf32, #tpu.memory_space<vmem>>, vector<1x128xf32>
    %cst_120 = arith.constant dense<0.000000e+00> : vector<16xf32>
    %191 = vector.multi_reduction <add>, %188, %cst_120 [1] : vector<16x256xf32> to vector<16xf32>
    %192 = vector.shape_cast %191 : vector<16xf32> to vector<16x1xf32>
    %cst_121 = arith.constant 3.906250e-03 : f32
    %193 = vector.broadcast %cst_121 : f32 to vector<16x1xf32>
    %194 = arith.mulf %192, %193 : vector<16x1xf32>
    %195 = vector.broadcast %194 : vector<16x1xf32> to vector<16x128xf32>
    %196 = arith.mulf %195, %189 : vector<16x128xf32>
    %cst_122 = arith.constant dense<0.000000e+00> : vector<128xf32>
    %197 = vector.multi_reduction <add>, %196, %cst_122 [0] : vector<16x128xf32> to vector<128xf32>
    %198 = vector.shape_cast %197 : vector<128xf32> to vector<1x128xf32>
    %199 = arith.addf %198, %190 : vector<1x128xf32>
    %c0_123 = arith.constant 0 : index
    %c0_124 = arith.constant 0 : index
    %c0_125 = arith.constant 0 : index
    %200 = vector.load %arg11[%c0_123, %c0_124, %c0_125] : memref<1x1x128xf32, #tpu.memory_space<vmem>>, vector<1x1x128xf32>
    %201 = vector.shape_cast %200 : vector<1x1x128xf32> to vector<1x128xf32>
    %202 = vector.shape_cast %199 : vector<1x128xf32> to vector<1x1x128xf32>
    tpu.vector_store %arg11[%c0_123, %c0_124, %c0_125], %202 {strides = array<i32>} : memref<1x1x128xf32, #tpu.memory_space<vmem>>, vector<1x1x128xf32>,
    return
  }
  func.func @transform_0(%arg0: i32) -> (i32, i32, i32) {
    %c0_i32 = arith.constant 0 : i32
    %c0_i32_0 = arith.constant 0 : i32
    %c0_i32_1 = arith.constant 0 : i32
    return %arg0, %c0_i32, %c0_i32_0 : i32, i32, i32
  }
  func.func @transform_1(%arg0: i32) -> (i32, i32) {
    %c0_i32 = arith.constant 0 : i32
    %c0_i32_0 = arith.constant 0 : i32
    %c0_i32_1 = arith.constant 0 : i32
    return %c0_i32, %c0_i32_0 : i32, i32
  }
  func.func @transform_2(%arg0: i32) -> (i32, i32, i32) {
    %c0_i32 = arith.constant 0 : i32
    %c0_i32_0 = arith.constant 0 : i32
    %c0_i32_1 = arith.constant 0 : i32
    %c0_i32_2 = arith.constant 0 : i32
    return %c0_i32, %c0_i32_0, %c0_i32_1 : i32, i32, i32
  }
  func.func @transform_3(%arg0: i32) -> (i32, i32) {
    %c0_i32 = arith.constant 0 : i32
    %c0_i32_0 = arith.constant 0 : i32
    %c0_i32_1 = arith.constant 0 : i32
    return %c0_i32, %c0_i32_0 : i32, i32
  }
  func.func @transform_4(%arg0: i32) -> (i32, i32, i32) {
    %c0_i32 = arith.constant 0 : i32
    %c0_i32_0 = arith.constant 0 : i32
    %c0_i32_1 = arith.constant 0 : i32
    %c0_i32_2 = arith.constant 0 : i32
    return %c0_i32, %c0_i32_0, %c0_i32_1 : i32, i32, i32
  }
  func.func @transform_5(%arg0: i32) -> (i32, i32) {
    %c0_i32 = arith.constant 0 : i32
    %c0_i32_0 = arith.constant 0 : i32
    %c0_i32_1 = arith.constant 0 : i32
    return %c0_i32, %c0_i32_0 : i32, i32
  }
  func.func @transform_6(%arg0: i32) -> (i32, i32) {
    %c0_i32 = arith.constant 0 : i32
    %c0_i32_0 = arith.constant 0 : i32
    %c0_i32_1 = arith.constant 0 : i32
    return %c0_i32, %c0_i32_0 : i32, i32
  }
  func.func @transform_7(%arg0: i32) -> (i32, i32) {
    %c0_i32 = arith.constant 0 : i32
    %c0_i32_0 = arith.constant 0 : i32
    %c0_i32_1 = arith.constant 0 : i32
    return %c0_i32, %c0_i32_0 : i32, i32
  }
  func.func @transform_8(%arg0: i32) -> (i32, i32) {
    %c0_i32 = arith.constant 0 : i32
    %c0_i32_0 = arith.constant 0 : i32
    %c0_i32_1 = arith.constant 0 : i32
    return %c0_i32, %c0_i32_0 : i32, i32
  }
  func.func @transform_9(%arg0: i32) -> (i32, i32) {
    %c0_i32 = arith.constant 0 : i32
    %c0_i32_0 = arith.constant 0 : i32
    %c0_i32_1 = arith.constant 0 : i32
    return %c0_i32, %c0_i32_0 : i32, i32
  }
  func.func @transform_10(%arg0: i32) -> (i32, i32, i32) {
    %c0_i32 = arith.constant 0 : i32
    %c0_i32_0 = arith.constant 0 : i32
    %c0_i32_1 = arith.constant 0 : i32
    return %arg0, %c0_i32, %c0_i32_0 : i32, i32, i32
  }
}

</mosaic_0001>

<llo_original>
// kernel: tpu_custom_call.1
$region0: #{tpu_custom_call.1}
  #allocation0 [shape = 'u32[]', space=smem, size = 0x4, offset = 0x4, fixed_abs, tag = 'smem constant byte address 0x4 - core index']
  #allocation1 [shape = 'u32[144,128]{1,0:T(1,128)}', space=vmem, size = 0x12000, scoped, tag = 'internal scratch']
  %s0 = inlined_call_operand.vmem [shape: f32[2,8,256], index: 0, kind: input, shape index: {}]
  %s1 = inlined_call_operand.vmem [shape: f32[9,256], index: 1, kind: input, shape index: {}]
  %s2 = inlined_call_operand.vmem [shape: bf16[9,8,8], index: 2, kind: input, shape index: {}]
  %s3 = inlined_call_operand.vmem [shape: f32[8,1], index: 3, kind: input, shape index: {}]
  %s4 = inlined_call_operand.vmem [shape: f32[9,8,1], index: 4, kind: input, shape index: {}]
  %s5 = inlined_call_operand.vmem [shape: f32[8,1], index: 5, kind: input, shape index: {}]
  %s6 = inlined_call_operand.vmem [shape: bf16[16,8], index: 6, kind: input, shape index: {}]
  %s7 = inlined_call_operand.vmem [shape: f32[16,1], index: 7, kind: input, shape index: {}]
  %s8 = inlined_call_operand.vmem [shape: f32[16,128], index: 8, kind: input, shape index: {}]
  %s9 = inlined_call_operand.vmem [shape: f32[1,128], index: 9, kind: input, shape index: {}]
  %s10 = inlined_call_operand.hbm [shape: f32[2,1,128], index: 10, kind: output, shape index: {}]
  %s11 = sld [smem:[#allocation0]]
  $region73: #{tpu_custom_call.1} parent=0
    _
  %s13 = ssub.s32 1, %s11
  %s14 = scalar_select 0, %s13, %s11
  $region1: #{tpu_custom_call.1} parent=0
    #allocation2 [shape = 'u8[1024]{0}', space=vmem, size = 0x400, scoped, tag = 'output window, operand 0']
    #allocation3 [shape = 's32[2]{0}', space=sflag, size = 0x8, scoped, tag = 'scoped memory for tpu_custom_call.1']
    %15 = vsyncpa [#allocation3], 0
    %s16 = scalar_lea.sflag [#allocation3], 1
    %17 = vsyncpa %s16, 0
    loop: start=0, step=1, limit=4
    $region2: #{tpu_custom_call.1} parent=1 // loop_pre_header
      _
    $region3: #{tpu_custom_call.1} parent=1 // loop_header
      %s19 = sphi 0, %s23
      %p20 = scmp.ge.s32.totalorder %s19, 4
      %s29 = sphi 0, %s31
      %s32 = sphi 0, %s29
      %s33 = sphi 0, %s32
      %s49 = sphi 0, %s33
      %s53 = sphi 0, %s53
      %s55 = sphi 0, %s53
      %s56 = sphi 0, %s55
      %s70 = sphi 0, %s56
      %s74 = sphi 0, %s74
      %s76 = sphi 0, %s74
      %s77 = sphi 0, %s76
      %s91 = sphi 0, %s77
      %s95 = sphi 0, %s95
      %s97 = sphi 0, %s95
      %s98 = sphi 0, %s97
      %s112 = sphi 0, %s98
      %s116 = sphi 0, %s116
      %s118 = sphi 0, %s116
      %s119 = sphi 0, %s118
      %s133 = sphi 0, %s119
      %s137 = sphi 0, %s137
      %s139 = sphi 0, %s137
      %s140 = sphi 0, %s139
      %s154 = sphi 0, %s140
      %s158 = sphi 0, %s158
      %s160 = sphi 0, %s158
      %s161 = sphi 0, %s160
      %s175 = sphi 0, %s161
      %s179 = sphi 0, %s179
      %s181 = sphi 0, %s179
      %s182 = sphi 0, %s181
      %s196 = sphi 0, %s182
      %s200 = sphi 0, %s200
      %s202 = sphi 0, %s200
      %s203 = sphi 0, %s202
      %s217 = sphi 0, %s203
      %s221 = sphi 0, %s221
      %s223 = sphi 0, %s221
      %s224 = sphi 0, %s223
      %s238 = sphi 0, %s224
      %s244 = sphi 0, %s246
      %s247 = sphi 0, %s244
      %s248 = sphi 0, %s247
      %s264 = sphi 0, %s248
    $region4: #{tpu_custom_call.1} parent=1 // loop_header_branch
      %22 = sbr.rel (%p20) target = $region8
    $region5: #{tpu_custom_call.1} parent=1 // loop_body
      %s24 = ssub.s32 %s19, 1
      %s25 = ssub.s32 %s19, 2
      %s26 = sadd.s32 %s19, 1
      %s27 = ssub.s32 %s19, %s26
      %p28 = scmp.eq.s32.totalorder %s27, 0
      %s30 = sadd.s32 %s29, 1
      %s31 = scalar_select %p28, %s29, %s30
      %p34 = pneg %p28
      %p35 = scmp.eq.s32.totalorder %s19, 1
      %p36 = por %p34, %p35
      %p37 = scmp.ne.s32.totalorder %s29, %s32
      %p38 = scmp.eq.s32.totalorder %s19, 0
      %p39 = por %p37, %p38
      %p40 = scmp.ne.s32.totalorder %s29, %s32
      %p41 = scmp.eq.s32.totalorder %s24, 1
      %p42 = por %p40, %p41
      %p43 = scmp.ne.s32.totalorder %s32, %s33
      %p44 = scmp.eq.s32.totalorder %s24, 0
      %p45 = por %p43, %p44
      %p46 = scmp.ne.s32.totalorder %s32, %s33
      %p47 = scmp.eq.s32.totalorder %s25, 1
      %p48 = por %p46, %p47
      %p50 = scmp.ne.s32.totalorder %s33, %s49
      %p51 = scmp.eq.s32.totalorder %s25, 0
      %p52 = por %p50, %p51
      %s54 = sadd.s32 %s53, 1
      %p57 = scmp.eq.s32.totalorder %s19, 1
      %p58 = scmp.ne.s32.totalorder %s53, %s55
      %p59 = scmp.eq.s32.totalorder %s19, 0
      %p60 = por %p58, %p59
      %p61 = scmp.ne.s32.totalorder %s53, %s55
      %p62 = scmp.eq.s32.totalorder %s24, 1
      %p63 = por %p61, %p62
      %p64 = scmp.ne.s32.totalorder %s55, %s56
      %p65 = scmp.eq.s32.totalorder %s24, 0
      %p66 = por %p64, %p65
      %p67 = scmp.ne.s32.totalorder %s55, %s56
      %p68 = scmp.eq.s32.totalorder %s25, 1
      %p69 = por %p67, %p68
      %p71 = scmp.ne.s32.totalorder %s56, %s70
      %p72 = scmp.eq.s32.totalorder %s25, 0
      %p73 = por %p71, %p72
      %s75 = sadd.s32 %s74, 1
      %p78 = scmp.eq.s32.totalorder %s19, 1
      %p79 = scmp.ne.s32.totalorder %s74, %s76
      %p80 = scmp.eq.s32.totalorder %s19, 0
      %p81 = por %p79, %p80
      %p82 = scmp.ne.s32.totalorder %s74, %s76
      %p83 = scmp.eq.s32.totalorder %s24, 1
      %p84 = por %p82, %p83
      %p85 = scmp.ne.s32.totalorder %s76, %s77
      %p86 = scmp.eq.s32.totalorder %s24, 0
      %p87 = por %p85, %p86
      %p88 = scmp.ne.s32.totalorder %s76, %s77
      %p89 = scmp.eq.s32.totalorder %s25, 1
      %p90 = por %p88, %p89
      %p92 = scmp.ne.s32.totalorder %s77, %s91
      %p93 = scmp.eq.s32.totalorder %s25, 0
      %p94 = por %p92, %p93
      %s96 = sadd.s32 %s95, 1
      %p99 = scmp.eq.s32.totalorder %s19, 1
      %p100 = scmp.ne.s32.totalorder %s95, %s97
      %p101 = scmp.eq.s32.totalorder %s19, 0
      %p102 = por %p100, %p101
      %p103 = scmp.ne.s32.totalorder %s95, %s97
      %p104 = scmp.eq.s32.totalorder %s24, 1
      %p105 = por %p103, %p104
      %p106 = scmp.ne.s32.totalorder %s97, %s98
      %p107 = scmp.eq.s32.totalorder %s24, 0
      %p108 = por %p106, %p107
      %p109 = scmp.ne.s32.totalorder %s97, %s98
      %p110 = scmp.eq.s32.totalorder %s25, 1
      %p111 = por %p109, %p110
      %p113 = scmp.ne.s32.totalorder %s98, %s112
      %p114 = scmp.eq.s32.totalorder %s25, 0
      %p115 = por %p113, %p114
      %s117 = sadd.s32 %s116, 1
      %p120 = scmp.eq.s32.totalorder %s19, 1
      %p121 = scmp.ne.s32.totalorder %s116, %s118
      %p122 = scmp.eq.s32.totalorder %s19, 0
      %p123 = por %p121, %p122
      %p124 = scmp.ne.s32.totalorder %s116, %s118
      %p125 = scmp.eq.s32.totalorder %s24, 1
      %p126 = por %p124, %p125
      %p127 = scmp.ne.s32.totalorder %s118, %s119
      %p128 = scmp.eq.s32.totalorder %s24, 0
      %p129 = por %p127, %p128
      %p130 = scmp.ne.s32.totalorder %s118, %s119
      %p131 = scmp.eq.s32.totalorder %s25, 1
      %p132 = por %p130, %p131
      %p134 = scmp.ne.s32.totalorder %s119, %s133
      %p135 = scmp.eq.s32.totalorder %s25, 0
      %p136 = por %p134, %p135
      %s138 = sadd.s32 %s137, 1
      %p141 = scmp.eq.s32.totalorder %s19, 1
      %p142 = scmp.ne.s32.totalorder %s137, %s139
      %p143 = scmp.eq.s32.totalorder %s19, 0
      %p144 = por %p142, %p143
      %p145 = scmp.ne.s32.totalorder %s137, %s139
      %p146 = scmp.eq.s32.totalorder %s24, 1
      %p147 = por %p145, %p146
      %p148 = scmp.ne.s32.totalorder %s139, %s140
      %p149 = scmp.eq.s32.totalorder %s24, 0
      %p150 = por %p148, %p149
      %p151 = scmp.ne.s32.totalorder %s139, %s140
      %p152 = scmp.eq.s32.totalorder %s25, 1
      %p153 = por %p151, %p152
      %p155 = scmp.ne.s32.totalorder %s140, %s154
      %p156 = scmp.eq.s32.totalorder %s25, 0
      %p157 = por %p155, %p156
      %s159 = sadd.s32 %s158, 1
      %p162 = scmp.eq.s32.totalorder %s19, 1
      %p163 = scmp.ne.s32.totalorder %s158, %s160
      %p164 = scmp.eq.s32.totalorder %s19, 0
      %p165 = por %p163, %p164
      %p166 = scmp.ne.s32.totalorder %s158, %s160
      %p167 = scmp.eq.s32.totalorder %s24, 1
      %p168 = por %p166, %p167
      %p169 = scmp.ne.s32.totalorder %s160, %s161
      %p170 = scmp.eq.s32.totalorder %s24, 0
      %p171 = por %p169, %p170
      %p172 = scmp.ne.s32.totalorder %s160, %s161
      %p173 = scmp.eq.s32.totalorder %s25, 1
      %p174 = por %p172, %p173
      %p176 = scmp.ne.s32.totalorder %s161, %s175
      %p177 = scmp.eq.s32.totalorder %s25, 0
      %p178 = por %p176, %p177
      %s180 = sadd.s32 %s179, 1
      %p183 = scmp.eq.s32.totalorder %s19, 1
      %p184 = scmp.ne.s32.totalorder %s179, %s181
      %p185 = scmp.eq.s32.totalorder %s19, 0
      %p186 = por %p184, %p185
      %p187 = scmp.ne.s32.totalorder %s179, %s181
      %p188 = scmp.eq.s32.totalorder %s24, 1
      %p189 = por %p187, %p188
      %p190 = scmp.ne.s32.totalorder %s181, %s182
      %p191 = scmp.eq.s32.totalorder %s24, 0
      %p192 = por %p190, %p191
      %p193 = scmp.ne.s32.totalorder %s181, %s182
      %p194 = scmp.eq.s32.totalorder %s25, 1
      %p195 = por %p193, %p194
      %p197 = scmp.ne.s32.totalorder %s182, %s196
      %p198 = scmp.eq.s32.totalorder %s25, 0
      %p199 = por %p197, %p198
      %s201 = sadd.s32 %s200, 1
      %p204 = scmp.eq.s32.totalorder %s19, 1
      %p205 = scmp.ne.s32.totalorder %s200, %s202
      %p206 = scmp.eq.s32.totalorder %s19, 0
      %p207 = por %p205, %p206
      %p208 = scmp.ne.s32.totalorder %s200, %s202
      %p209 = scmp.eq.s32.totalorder %s24, 1
      %p210 = por %p208, %p209
      %p211 = scmp.ne.s32.totalorder %s202, %s203
      %p212 = scmp.eq.s32.totalorder %s24, 0
      %p213 = por %p211, %p212
      %p214 = scmp.ne.s32.totalorder %s202, %s203
      %p215 = scmp.eq.s32.totalorder %s25, 1
      %p216 = por %p214, %p215
      %p218 = scmp.ne.s32.totalorder %s203, %s217
      %p219 = scmp.eq.s32.totalorder %s25, 0
      %p220 = por %p218, %p219
      %s222 = sadd.s32 %s221, 1
      %p225 = scmp.eq.s32.totalorder %s19, 1
      %p226 = scmp.ne.s32.totalorder %s221, %s223
      %p227 = scmp.eq.s32.totalorder %s19, 0
      %p228 = por %p226, %p227
      %p229 = scmp.ne.s32.totalorder %s221, %s223
      %p230 = scmp.eq.s32.totalorder %s24, 1
      %p231 = por %p229, %p230
      %p232 = scmp.ne.s32.totalorder %s223, %s224
      %p233 = scmp.eq.s32.totalorder %s24, 0
      %p234 = por %p232, %p233
      %p235 = scmp.ne.s32.totalorder %s223, %s224
      %p236 = scmp.eq.s32.totalorder %s25, 1
      %p237 = por %p235, %p236
      %p239 = scmp.ne.s32.totalorder %s224, %s238
      %p240 = scmp.eq.s32.totalorder %s25, 0
      %p241 = por %p239, %p240
      %s242 = ssub.s32 %s19, %s26
      %p243 = scmp.eq.s32.totalorder %s242, 0
      %s245 = sadd.s32 %s244, 1
      %s246 = scalar_select %p243, %s244, %s245
      %p249 = pneg %p243
      %p250 = scmp.eq.s32.totalorder %s19, 1
      %p251 = por %p249, %p250
      %p252 = scmp.ne.s32.totalorder %s244, %s247
      %p253 = scmp.eq.s32.totalorder %s19, 0
      %p254 = por %p252, %p253
      %p255 = scmp.ne.s32.totalorder %s244, %s247
      %p256 = scmp.eq.s32.totalorder %s24, 1
      %p257 = por %p255, %p256
      %p258 = scmp.ne.s32.totalorder %s247, %s248
      %p259 = scmp.eq.s32.totalorder %s24, 0
      %p260 = por %p258, %p259
      %p261 = scmp.ne.s32.totalorder %s247, %s248
      %p262 = scmp.eq.s32.totalorder %s25, 1
      %p263 = por %p261, %p262
      %p265 = scmp.ne.s32.totalorder %s248, %s264
      %p266 = scmp.eq.s32.totalorder %s25, 0
      %p267 = por %p265, %p266
      %p268 = scmp.le.s32.totalorder 1, %s19
      %p269 = scmp.lt.s32.totalorder %s19, 3
      %p270 = pnand %p268, %p269
      %p271 = pneg %p270
      // Predicated region
      $region9: #{tpu_custom_call.1} parent=5 // pred_check
        _
      $region10: #{tpu_custom_call.1} parent=5 // pred_check_branch
        %273 = sbr.rel (%p270) target = $region12
      $region11: #{tpu_custom_call.1} parent=5 // pred_region
        %s274 = ssub.s32 %s19, 1
        // Predicated region
        $region13: #{tpu_custom_call.1} parent=11 // pred_check
          %p275 = pneg %p66
        $region14: #{tpu_custom_call.1} parent=11 // pred_check_branch
          %277 = sbr.rel (%p275) target = $region16
        $region15: #{tpu_custom_call.1} parent=11 // pred_region
          _
        $region16: #{tpu_custom_call.1} parent=11 // pred_fallthru
          _
        // Predicated region
        $region17: #{tpu_custom_call.1} parent=11 // pred_check
          %p278 = pneg %p87
        $region18: #{tpu_custom_call.1} parent=11 // pred_check_branch
          %280 = sbr.rel (%p278) target = $region20
        $region19: #{tpu_custom_call.1} parent=11 // pred_region
          _
        $region20: #{tpu_custom_call.1} parent=11 // pred_fallthru
          _
        // Predicated region
        $region21: #{tpu_custom_call.1} parent=11 // pred_check
          %p281 = pneg %p108
        $region22: #{tpu_custom_call.1} parent=11 // pred_check_branch
          %283 = sbr.rel (%p281) target = $region24
        $region23: #{tpu_custom_call.1} parent=11 // pred_region
          _
        $region24: #{tpu_custom_call.1} parent=11 // pred_fallthru
          _
        // Predicated region
        $region25: #{tpu_custom_call.1} parent=11 // pred_check
          %p284 = pneg %p129
        $region26: #{tpu_custom_call.1} parent=11 // pred_check_branch
          %286 = sbr.rel (%p284) target = $region28
        $region27: #{tpu_custom_call.1} parent=11 // pred_region
          _
        $region28: #{tpu_custom_call.1} parent=11 // pred_fallthru
          _
        // Predicated region
        $region29: #{tpu_custom_call.1} parent=11 // pred_check
          %p287 = pneg %p150
        $region30: #{tpu_custom_call.1} parent=11 // pred_check_branch
          %289 = sbr.rel (%p287) target = $region32
        $region31: #{tpu_custom_call.1} parent=11 // pred_region
          _
        $region32: #{tpu_custom_call.1} parent=11 // pred_fallthru
          _
        // Predicated region
        $region33: #{tpu_custom_call.1} parent=11 // pred_check
          %p290 = pneg %p171
        $region34: #{tpu_custom_call.1} parent=11 // pred_check_branch
          %292 = sbr.rel (%p290) target = $region36
        $region35: #{tpu_custom_call.1} parent=11 // pred_region
          _
        $region36: #{tpu_custom_call.1} parent=11 // pred_fallthru
          _
        // Predicated region
        $region37: #{tpu_custom_call.1} parent=11 // pred_check
          %p293 = pneg %p192
        $region38: #{tpu_custom_call.1} parent=11 // pred_check_branch
          %295 = sbr.rel (%p293) target = $region40
        $region39: #{tpu_custom_call.1} parent=11 // pred_region
          _
        $region40: #{tpu_custom_call.1} parent=11 // pred_fallthru
          _
        // Predicated region
        $region41: #{tpu_custom_call.1} parent=11 // pred_check
          %p296 = pneg %p213
        $region42: #{tpu_custom_call.1} parent=11 // pred_check_branch
          %298 = sbr.rel (%p296) target = $region44
        $region43: #{tpu_custom_call.1} parent=11 // pred_region
          _
        $region44: #{tpu_custom_call.1} parent=11 // pred_fallthru
          _
        // Predicated region
        $region45: #{tpu_custom_call.1} parent=11 // pred_check
          %p299 = pneg %p234
        $region46: #{tpu_custom_call.1} parent=11 // pred_check_branch
          %301 = sbr.rel (%p299) target = $region48
        $region47: #{tpu_custom_call.1} parent=11 // pred_region
          _
        $region48: #{tpu_custom_call.1} parent=11 // pred_fallthru
          _
      $region12: #{tpu_custom_call.1} parent=5 // pred_fallthru
        _
      %p302 = scmp.lt.s32.totalorder %s19, 2
      // Predicated region
      $region49: #{tpu_custom_call.1} parent=5 // pred_check
        %p303 = pneg %p302
      $region50: #{tpu_custom_call.1} parent=5 // pred_check_branch
        %305 = sbr.rel (%p303) target = $region52
      $region51: #{tpu_custom_call.1} parent=5 // pred_region
        // Predicated region
        $region53: #{tpu_custom_call.1} parent=51 // pred_check
          %p306 = pneg %p39
        $region54: #{tpu_custom_call.1} parent=51 // pred_check_branch
          %308 = sbr.rel (%p306) target = $region56
        $region55: #{tpu_custom_call.1} parent=51 // pred_region
          %p309 = scmp.lt.s32.totalorder %s19, 1
          %s310 = scalar_select %p309, %s19, 1
          %s311 = smul.addr %s310, 2
          %s312 = smul.addr %s311, 8
          %s313 = scalar_lea.vmem %s0, %s312
        $region56: #{tpu_custom_call.1} parent=51 // pred_fallthru
          _
      $region52: #{tpu_custom_call.1} parent=5 // pred_fallthru
        _
      %p314 = scmp.le.s32.totalorder 1, %s19
      %p315 = scmp.lt.s32.totalorder %s19, 3
      %p316 = pnand %p314, %p315
      %p317 = pneg %p316
      // Predicated region
      $region57: #{tpu_custom_call.1} parent=5 // pred_check
        _
      $region58: #{tpu_custom_call.1} parent=5 // pred_check_branch
        %319 = sbr.rel (%p316) target = $region60
      $region59: #{tpu_custom_call.1} parent=5 // pred_region
        %s320 = ssub.s32 %s19, 1
        %p321 = scmp.lt.s32.totalorder %s24, 1
        %s322 = scalar_select %p321, %s24, 1
        %s323 = smul.addr %s322, 2
        %s324 = smul.addr %s323, 8
        %s325 = scalar_lea.vmem %s0, %s324
        %p326 = pneg %p45
        %p327 = pneg %p42
        %p328 = pneg %p66
        %p329 = pneg %p63
        %p330 = pneg %p87
        %p331 = pneg %p84
        %p332 = pneg %p108
        %p333 = pneg %p105
        %p334 = pneg %p129
        %p335 = pneg %p126
        %p336 = pneg %p150
        %p337 = pneg %p147
        %p338 = pneg %p171
        %p339 = pneg %p168
        %p340 = pneg %p192
        %p341 = pneg %p189
        %p342 = pneg %p213
        %p343 = pneg %p210
        %p344 = pneg %p234
        %p345 = pneg %p231
        %p346 = pneg %p260
        %p347 = pneg %p257
        %s348 = sand.u32 %s247, 1
        %s349 = scalar_lea.sflag [#allocation3], %s348
        %s350 = sand.u32 %s247, 1
        %s351 = scalar_lea.vmem [#allocation2], %s350
        %p352 = scmp.lt.s32.totalorder %s24, 1
        %s353 = scalar_select %p352, %s24, 1
        %s354 = smul.addr %s353, 2
        %s355 = smul.addr %s354, 8
        %s356 = scalar_lea.vmem %s0, %s355
        %v358 = vld [vmem:[%s356] sm:$0xff]
        %v359 = vld [vmem:[%s356 + $0x8] sm:$0xff]
        %v360 = vmul.f32 %v358, 50.0
        %v361 = vmul.f32 %v359, 50.0
        %v362 = vround.ne.pseudo %v360
        %v363 = vround.ne.pseudo %v361
        %v364 = vmax.f32 %v362, -128.0
        %v365 = vmax.f32 %v363, -128.0
        %v366 = vmin.f32 %v364, 127.0
        %v367 = vmin.f32 %v365, 127.0
        %v368 = vmul.f32 %v366, 0.02
        %v369 = vmul.f32 %v367, 0.02
        %370 = vrot.lane.b32.xlu0 %v368, 17
        %v371 = vpop.permute.xlu0 %370
        %372 = vrot.lane.b32.xlu0 %v369, 17
        %v373 = vpop.permute.xlu0 %372
        %v374 = vlaneseq
        %v375 = vand.u32 %v374, 127
        %vm376 = vcmp.lt.s32.totalorder %v375, 17
        %v377 = vsel %vm376, %v371, %v373
        %v378 = vsel %vm376, %v373, %v371
        %v379 = vld [vmem:[%s1] ss:$8 sm:$0x3]
        %v381 = vlaneseq
        %v382 = vshrl.u32 %v381, 7
        %v383 = vsub.s32 0, %v382
        %v384 = vrot.slane %v379, %v383
        %v385 = vlaneseq
        %v386 = vshrl.u32 %v385, 7
        %v387 = vsub.s32 1, %v386
        %v388 = vrot.slane %v379, %v387
        %v391 = vmul.f32 %v378, %v384
        %v392 = vmul.f32 %v377, %v388
        %v393 = vpack.c.bf16 %v391, %v391
        %v394 = vpack.c.bf16 %v392, %v392
        %v395 = vld [vmem:[%s2] sm:$0xf]
        %396 = vrot.lane.b32.xlu0 %v368, 16
        %v397 = vpop.permute.xlu0 %396
        %398 = vrot.lane.b32.xlu0 %v369, 16
        %v399 = vpop.permute.xlu0 %398
        %vm400 = vcmp.lt.s32.totalorder %v375, 16
        %v401 = vsel %vm400, %v397, %v399
        %v402 = vsel %vm400, %v399, %v397
        %s403 = scalar_lea.vmem %s1, 1
        %v404 = vld [vmem:[%s403] ss:$8 sm:$0x3]
        %v406 = vlaneseq
        %v407 = vshrl.u32 %v406, 7
        %v408 = vsub.s32 0, %v407
        %v409 = vrot.slane %v404, %v408
        %v410 = vlaneseq
        %v411 = vshrl.u32 %v410, 7
        %v412 = vsub.s32 1, %v411
        %v413 = vrot.slane %v404, %v412
        %v416 = vmul.f32 %v402, %v409
        %v417 = vmul.f32 %v401, %v413
        %v418 = vpack.c.bf16 %v416, %v416
        %v419 = vpack.c.bf16 %v417, %v417
        %s420 = scalar_lea.vmem %s2, 4
        %v421 = vld [vmem:[%s420] sm:$0xf]
        %vm422 = vcmask 64512
        %v424 = vsel %vm422, %v421, 0
        %vm426 = vcmask 1043456
        %v428 = vsel %vm426, %v418, 0
        %v431 = vsel %vm426, %v419, 0
        %433 = vmatprep.subr.bf16.mxu0 0
        %434 = vmatpush1.bf16.msra.mxu0 0
        %435 = vmatprep.subr.bf16.mxu0 0
        %436 = vmatpush1.bf16.msra.mxu0 0
        %437 = vmatprep.subr.bf16.mxu0 0
        %438 = vmatpush1.bf16.msra.mxu0 0
        %439 = vmatprep.subr.bf16.mxu0 0
        %440 = vmatpush1.bf16.msra.mxu0 0
        %441 = vmatprep.subr.bf16.mxu0 0
        %442 = vmatpush1.bf16.msra.mxu0 0
        %443 = vmatprep.subr.bf16.mxu0 0
        %444 = vmatpush1.bf16.msra.mxu0 0
        %445 = vmatprep.subr.bf16.mxu0 0
        %446 = vmatpush1.bf16.msra.mxu0 0
        %447 = vmatprep.subr.bf16.mxu0 %v431
        %448 = vmatpush1.bf16.msra.mxu0 %v428
        %449 = vmatprep.subr.bf16.mxu0 0
        %450 = vmatpush2.bf16.msra.mxu0 0
        %451 = vmatprep.subr.bf16.mxu0 0
        %452 = vmatpush2.bf16.msra.mxu0 0
        %453 = vmatprep.subr.bf16.mxu0 0
        %454 = vmatpush2.bf16.msra.mxu0 0
        %455 = vmatprep.subr.bf16.mxu0 0
        %456 = vmatpush2.bf16.msra.mxu0 0
        %457 = vmatprep.subr.bf16.mxu0 0
        %458 = vmatpush2.bf16.msra.mxu0 0
        %459 = vmatprep.subr.bf16.mxu0 0
        %460 = vmatpush2.bf16.msra.mxu0 0
        %461 = vmatprep.subr.bf16.mxu0 0
        %462 = vmatpush2.bf16.msra.mxu0 0
        %463 = vmatprep.subr.bf16.mxu0 0
        %464 = vmatpush2.bf16.msra.mxu0 0
        %465 = vmatprep.mubr.bf16.mxu0 0
        %466 = vmatmul.mubr.bf16.gmra.mxu0 %v424
        %v467 = vpop.f32.mrf.mxu0
        %v468 = vadd.f32 0.0, %v467
        %v469 = vpop.f32.mrf.mxu0
        %v470 = vadd.f32 0.0, %v469
        %v471 = vpop.f32.mrf.mxu0
        %v472 = vpop.f32.mrf.mxu0
        %473 = vdwg.mxu0
        %v475 = vsel %vm422, %v395, 0
        %v478 = vsel %vm426, %v393, 0
        %v481 = vsel %vm426, %v394, 0
        %483 = vmatprep.subr.bf16.mxu0 0
        %484 = vmatpush1.bf16.msra.mxu0 0
        %485 = vmatprep.subr.bf16.mxu0 0
        %486 = vmatpush1.bf16.msra.mxu0 0
        %487 = vmatprep.subr.bf16.mxu0 0
        %488 = vmatpush1.bf16.msra.mxu0 0
        %489 = vmatprep.subr.bf16.mxu0 0
        %490 = vmatpush1.bf16.msra.mxu0 0
        %491 = vmatprep.subr.bf16.mxu0 0
        %492 = vmatpush1.bf16.msra.mxu0 0
        %493 = vmatprep.subr.bf16.mxu0 0
        %494 = vmatpush1.bf16.msra.mxu0 0
        %495 = vmatprep.subr.bf16.mxu0 0
        %496 = vmatpush1.bf16.msra.mxu0 0
        %497 = vmatprep.subr.bf16.mxu0 %v481
        %498 = vmatpush1.bf16.msra.mxu0 %v478
        %499 = vmatprep.subr.bf16.mxu0 0
        %500 = vmatpush2.bf16.msra.mxu0 0
        %501 = vmatprep.subr.bf16.mxu0 0
        %502 = vmatpush2.bf16.msra.mxu0 0
        %503 = vmatprep.subr.bf16.mxu0 0
        %504 = vmatpush2.bf16.msra.mxu0 0
        %505 = vmatprep.subr.bf16.mxu0 0
        %506 = vmatpush2.bf16.msra.mxu0 0
        %507 = vmatprep.subr.bf16.mxu0 0
        %508 = vmatpush2.bf16.msra.mxu0 0
        %509 = vmatprep.subr.bf16.mxu0 0
        %510 = vmatpush2.bf16.msra.mxu0 0
        %511 = vmatprep.subr.bf16.mxu0 0
        %512 = vmatpush2.bf16.msra.mxu0 0
        %513 = vmatprep.subr.bf16.mxu0 0
        %514 = vmatpush2.bf16.msra.mxu0 0
        %515 = vmatprep.mubr.bf16.mxu0 0
        %516 = vmatmul.mubr.bf16.gmra.mxu0 %v475
        %v517 = vpop.f32.mrf.mxu0
        %v518 = vadd.f32 %v468, %v517
        %v519 = vpop.f32.mrf.mxu0
        %v520 = vadd.f32 %v470, %v519
        %v521 = vpop.f32.mrf.mxu0
        %v522 = vpop.f32.mrf.mxu0
        %523 = vdwg.mxu0
        %524 = vrot.lane.b32.xlu0 %v368, 15
        %v525 = vpop.permute.xlu0 %524
        %526 = vrot.lane.b32.xlu0 %v369, 15
        %v527 = vpop.permute.xlu0 %526
        %vm528 = vcmp.lt.s32.totalorder %v375, 15
        %v529 = vsel %vm528, %v525, %v527
        %v530 = vsel %vm528, %v527, %v525
        %s531 = scalar_lea.vmem %s1, 2
        %v532 = vld [vmem:[%s531] ss:$8 sm:$0x3]
        %v534 = vlaneseq
        %v535 = vshrl.u32 %v534, 7
        %v536 = vsub.s32 0, %v535
        %v537 = vrot.slane %v532, %v536
        %v538 = vlaneseq
        %v539 = vshrl.u32 %v538, 7
        %v540 = vsub.s32 1, %v539
        %v541 = vrot.slane %v532, %v540
        %v544 = vmul.f32 %v530, %v537
        %v545 = vmul.f32 %v529, %v541
        %v546 = vpack.c.bf16 %v544, %v544
        %v547 = vpack.c.bf16 %v545, %v545
        %s548 = scalar_lea.vmem %s2, 8
        %v549 = vld [vmem:[%s548] sm:$0xf]
        %v551 = vsel %vm422, %v549, 0
        %v554 = vsel %vm426, %v546, 0
        %v557 = vsel %vm426, %v547, 0
        %559 = vmatprep.subr.bf16.mxu0 0
        %560 = vmatpush1.bf16.msra.mxu0 0
        %561 = vmatprep.subr.bf16.mxu0 0
        %562 = vmatpush1.bf16.msra.mxu0 0
        %563 = vmatprep.subr.bf16.mxu0 0
        %564 = vmatpush1.bf16.msra.mxu0 0
        %565 = vmatprep.subr.bf16.mxu0 0
        %566 = vmatpush1.bf16.msra.mxu0 0
        %567 = vmatprep.subr.bf16.mxu0 0
        %568 = vmatpush1.bf16.msra.mxu0 0
        %569 = vmatprep.subr.bf16.mxu0 0
        %570 = vmatpush1.bf16.msra.mxu0 0
        %571 = vmatprep.subr.bf16.mxu0 0
        %572 = vmatpush1.bf16.msra.mxu0 0
        %573 = vmatprep.subr.bf16.mxu0 %v557
        %574 = vmatpush1.bf16.msra.mxu0 %v554
        %575 = vmatprep.subr.bf16.mxu0 0
        %576 = vmatpush2.bf16.msra.mxu0 0
        %577 = vmatprep.subr.bf16.mxu0 0
        %578 = vmatpush2.bf16.msra.mxu0 0
        %579 = vmatprep.subr.bf16.mxu0 0
        %580 = vmatpush2.bf16.msra.mxu0 0
        %581 = vmatprep.subr.bf16.mxu0 0
        %582 = vmatpush2.bf16.msra.mxu0 0
        %583 = vmatprep.subr.bf16.mxu0 0
        %584 = vmatpush2.bf16.msra.mxu0 0
        %585 = vmatprep.subr.bf16.mxu0 0
        %586 = vmatpush2.bf16.msra.mxu0 0
        %587 = vmatprep.subr.bf16.mxu0 0
        %588 = vmatpush2.bf16.msra.mxu0 0
        %589 = vmatprep.subr.bf16.mxu0 0
        %590 = vmatpush2.bf16.msra.mxu0 0
        %591 = vmatprep.mubr.bf16.mxu0 0
        %592 = vmatmul.mubr.bf16.gmra.mxu0 %v551
        %v593 = vpop.f32.mrf.mxu0
        %v594 = vadd.f32 0.0, %v593
        %v595 = vpop.f32.mrf.mxu0
        %v596 = vadd.f32 0.0, %v595
        %v597 = vpop.f32.mrf.mxu0
        %v598 = vpop.f32.mrf.mxu0
        %599 = vdwg.mxu0
        %v600 = vadd.f32 %v518, %v594
        %v601 = vadd.f32 %v520, %v596
        %602 = vrot.lane.b32.xlu0 %v368, 1
        %v603 = vpop.permute.xlu0 %602
        %604 = vrot.lane.b32.xlu0 %v369, 1
        %v605 = vpop.permute.xlu0 %604
        %vm606 = vcmp.lt.s32.totalorder %v375, 1
        %v607 = vsel %vm606, %v603, %v605
        %v608 = vsel %vm606, %v605, %v603
        %s609 = scalar_lea.vmem %s1, 3
        %v610 = vld [vmem:[%s609] ss:$8 sm:$0x3]
        %v612 = vlaneseq
        %v613 = vshrl.u32 %v612, 7
        %v614 = vsub.s32 0, %v613
        %v615 = vrot.slane %v610, %v614
        %v616 = vlaneseq
        %v617 = vshrl.u32 %v616, 7
        %v618 = vsub.s32 1, %v617
        %v619 = vrot.slane %v610, %v618
        %v622 = vmul.f32 %v608, %v615
        %v623 = vmul.f32 %v607, %v619
        %v624 = vpack.c.bf16 %v622, %v622
        %v625 = vpack.c.bf16 %v623, %v623
        %s626 = scalar_lea.vmem %s2, 12
        %v627 = vld [vmem:[%s626] sm:$0xf]
        %v629 = vsel %vm422, %v627, 0
        %v632 = vsel %vm426, %v624, 0
        %v635 = vsel %vm426, %v625, 0
        %637 = vmatprep.subr.bf16.mxu0 0
        %638 = vmatpush1.bf16.msra.mxu0 0
        %639 = vmatprep.subr.bf16.mxu0 0
        %640 = vmatpush1.bf16.msra.mxu0 0
        %641 = vmatprep.subr.bf16.mxu0 0
        %642 = vmatpush1.bf16.msra.mxu0 0
        %643 = vmatprep.subr.bf16.mxu0 0
        %644 = vmatpush1.bf16.msra.mxu0 0
        %645 = vmatprep.subr.bf16.mxu0 0
        %646 = vmatpush1.bf16.msra.mxu0 0
        %647 = vmatprep.subr.bf16.mxu0 0
        %648 = vmatpush1.bf16.msra.mxu0 0
        %649 = vmatprep.subr.bf16.mxu0 0
        %650 = vmatpush1.bf16.msra.mxu0 0
        %651 = vmatprep.subr.bf16.mxu0 %v635
        %652 = vmatpush1.bf16.msra.mxu0 %v632
        %653 = vmatprep.subr.bf16.mxu0 0
        %654 = vmatpush2.bf16.msra.mxu0 0
        %655 = vmatprep.subr.bf16.mxu0 0
        %656 = vmatpush2.bf16.msra.mxu0 0
        %657 = vmatprep.subr.bf16.mxu0 0
        %658 = vmatpush2.bf16.msra.mxu0 0
        %659 = vmatprep.subr.bf16.mxu0 0
        %660 = vmatpush2.bf16.msra.mxu0 0
        %661 = vmatprep.subr.bf16.mxu0 0
        %662 = vmatpush2.bf16.msra.mxu0 0
        %663 = vmatprep.subr.bf16.mxu0 0
        %664 = vmatpush2.bf16.msra.mxu0 0
        %665 = vmatprep.subr.bf16.mxu0 0
        %666 = vmatpush2.bf16.msra.mxu0 0
        %667 = vmatprep.subr.bf16.mxu0 0
        %668 = vmatpush2.bf16.msra.mxu0 0
        %669 = vmatprep.mubr.bf16.mxu0 0
        %670 = vmatmul.mubr.bf16.gmra.mxu0 %v629
        %v671 = vpop.f32.mrf.mxu0
        %v672 = vadd.f32 0.0, %v671
        %v673 = vpop.f32.mrf.mxu0
        %v674 = vadd.f32 0.0, %v673
        %v675 = vpop.f32.mrf.mxu0
        %v676 = vpop.f32.mrf.mxu0
        %677 = vdwg.mxu0
        %v678 = vadd.f32 %v600, %v672
        %v679 = vadd.f32 %v601, %v674
        %v680 = vpack.c.bf16 %v368, %v368
        %v681 = vpack.c.bf16 %v369, %v369
        %s682 = scalar_lea.vmem %s2, 16
        %v683 = vld [vmem:[%s682] sm:$0xf]
        %v685 = vsel %vm422, %v683, 0
        %v688 = vsel %vm426, %v680, 0
        %v691 = vsel %vm426, %v681, 0
        %693 = vmatprep.subr.bf16.mxu0 0
        %694 = vmatpush1.bf16.msra.mxu0 0
        %695 = vmatprep.subr.bf16.mxu0 0
        %696 = vmatpush1.bf16.msra.mxu0 0
        %697 = vmatprep.subr.bf16.mxu0 0
        %698 = vmatpush1.bf16.msra.mxu0 0
        %699 = vmatprep.subr.bf16.mxu0 0
        %700 = vmatpush1.bf16.msra.mxu0 0
        %701 = vmatprep.subr.bf16.mxu0 0
        %702 = vmatpush1.bf16.msra.mxu0 0
        %703 = vmatprep.subr.bf16.mxu0 0
        %704 = vmatpush1.bf16.msra.mxu0 0
        %705 = vmatprep.subr.bf16.mxu0 0
        %706 = vmatpush1.bf16.msra.mxu0 0
        %707 = vmatprep.subr.bf16.mxu0 %v691
        %708 = vmatpush1.bf16.msra.mxu0 %v688
        %709 = vmatprep.subr.bf16.mxu0 0
        %710 = vmatpush2.bf16.msra.mxu0 0
        %711 = vmatprep.subr.bf16.mxu0 0
        %712 = vmatpush2.bf16.msra.mxu0 0
        %713 = vmatprep.subr.bf16.mxu0 0
        %714 = vmatpush2.bf16.msra.mxu0 0
        %715 = vmatprep.subr.bf16.mxu0 0
        %716 = vmatpush2.bf16.msra.mxu0 0
        %717 = vmatprep.subr.bf16.mxu0 0
        %718 = vmatpush2.bf16.msra.mxu0 0
        %719 = vmatprep.subr.bf16.mxu0 0
        %720 = vmatpush2.bf16.msra.mxu0 0
        %721 = vmatprep.subr.bf16.mxu0 0
        %722 = vmatpush2.bf16.msra.mxu0 0
        %723 = vmatprep.subr.bf16.mxu0 0
        %724 = vmatpush2.bf16.msra.mxu0 0
        %725 = vmatprep.mubr.bf16.mxu0 0
        %726 = vmatmul.mubr.bf16.gmra.mxu0 %v685
        %v727 = vpop.f32.mrf.mxu0
        %v728 = vadd.f32 0.0, %v727
        %v729 = vpop.f32.mrf.mxu0
        %v730 = vadd.f32 0.0, %v729
        %v731 = vpop.f32.mrf.mxu0
        %v732 = vpop.f32.mrf.mxu0
        %733 = vdwg.mxu0
        %v734 = vadd.f32 %v678, %v728
        %v735 = vadd.f32 %v679, %v730
        %736 = vrot.lane.b32.xlu0 %v368, 127
        %v737 = vpop.permute.xlu0 %736
        %738 = vrot.lane.b32.xlu0 %v369, 127
        %v739 = vpop.permute.xlu0 %738
        %vm740 = vcmp.lt.s32.totalorder %v375, 127
        %v741 = vsel %vm740, %v737, %v739
        %v742 = vsel %vm740, %v739, %v737
        %s743 = scalar_lea.vmem %s1, 5
        %v744 = vld [vmem:[%s743] ss:$8 sm:$0x3]
        %v746 = vlaneseq
        %v747 = vshrl.u32 %v746, 7
        %v748 = vsub.s32 0, %v747
        %v749 = vrot.slane %v744, %v748
        %v750 = vlaneseq
        %v751 = vshrl.u32 %v750, 7
        %v752 = vsub.s32 1, %v751
        %v753 = vrot.slane %v744, %v752
        %v756 = vmul.f32 %v741, %v749
        %v757 = vmul.f32 %v742, %v753
        %v758 = vpack.c.bf16 %v756, %v756
        %v759 = vpack.c.bf16 %v757, %v757
        %s760 = scalar_lea.vmem %s2, 20
        %v761 = vld [vmem:[%s760] sm:$0xf]
        %v763 = vsel %vm422, %v761, 0
        %v766 = vsel %vm426, %v758, 0
        %v769 = vsel %vm426, %v759, 0
        %771 = vmatprep.subr.bf16.mxu0 0
        %772 = vmatpush1.bf16.msra.mxu0 0
        %773 = vmatprep.subr.bf16.mxu0 0
        %774 = vmatpush1.bf16.msra.mxu0 0
        %775 = vmatprep.subr.bf16.mxu0 0
        %776 = vmatpush1.bf16.msra.mxu0 0
        %777 = vmatprep.subr.bf16.mxu0 0
        %778 = vmatpush1.bf16.msra.mxu0 0
        %779 = vmatprep.subr.bf16.mxu0 0
        %780 = vmatpush1.bf16.msra.mxu0 0
        %781 = vmatprep.subr.bf16.mxu0 0
        %782 = vmatpush1.bf16.msra.mxu0 0
        %783 = vmatprep.subr.bf16.mxu0 0
        %784 = vmatpush1.bf16.msra.mxu0 0
        %785 = vmatprep.subr.bf16.mxu0 %v769
        %786 = vmatpush1.bf16.msra.mxu0 %v766
        %787 = vmatprep.subr.bf16.mxu0 0
        %788 = vmatpush2.bf16.msra.mxu0 0
        %789 = vmatprep.subr.bf16.mxu0 0
        %790 = vmatpush2.bf16.msra.mxu0 0
        %791 = vmatprep.subr.bf16.mxu0 0
        %792 = vmatpush2.bf16.msra.mxu0 0
        %793 = vmatprep.subr.bf16.mxu0 0
        %794 = vmatpush2.bf16.msra.mxu0 0
        %795 = vmatprep.subr.bf16.mxu0 0
        %796 = vmatpush2.bf16.msra.mxu0 0
        %797 = vmatprep.subr.bf16.mxu0 0
        %798 = vmatpush2.bf16.msra.mxu0 0
        %799 = vmatprep.subr.bf16.mxu0 0
        %800 = vmatpush2.bf16.msra.mxu0 0
        %801 = vmatprep.subr.bf16.mxu0 0
        %802 = vmatpush2.bf16.msra.mxu0 0
        %803 = vmatprep.mubr.bf16.mxu0 0
        %804 = vmatmul.mubr.bf16.gmra.mxu0 %v763
        %v805 = vpop.f32.mrf.mxu0
        %v806 = vadd.f32 0.0, %v805
        %v807 = vpop.f32.mrf.mxu0
        %v808 = vadd.f32 0.0, %v807
        %v809 = vpop.f32.mrf.mxu0
        %v810 = vpop.f32.mrf.mxu0
        %811 = vdwg.mxu0
        %v812 = vadd.f32 %v734, %v806
        %v813 = vadd.f32 %v735, %v808
        %814 = vrot.lane.b32.xlu0 %v368, 113
        %v815 = vpop.permute.xlu0 %814
        %816 = vrot.lane.b32.xlu0 %v369, 113
        %v817 = vpop.permute.xlu0 %816
        %vm818 = vcmp.lt.s32.totalorder %v375, 113
        %v819 = vsel %vm818, %v815, %v817
        %v820 = vsel %vm818, %v817, %v815
        %s821 = scalar_lea.vmem %s1, 6
        %v822 = vld [vmem:[%s821] ss:$8 sm:$0x3]
        %v824 = vlaneseq
        %v825 = vshrl.u32 %v824, 7
        %v826 = vsub.s32 0, %v825
        %v827 = vrot.slane %v822, %v826
        %v828 = vlaneseq
        %v829 = vshrl.u32 %v828, 7
        %v830 = vsub.s32 1, %v829
        %v831 = vrot.slane %v822, %v830
        %v834 = vmul.f32 %v819, %v827
        %v835 = vmul.f32 %v820, %v831
        %v836 = vpack.c.bf16 %v834, %v834
        %v837 = vpack.c.bf16 %v835, %v835
        %s838 = scalar_lea.vmem %s2, 24
        %v839 = vld [vmem:[%s838] sm:$0xf]
        %v841 = vsel %vm422, %v839, 0
        %v844 = vsel %vm426, %v836, 0
        %v847 = vsel %vm426, %v837, 0
        %849 = vmatprep.subr.bf16.mxu0 0
        %850 = vmatpush1.bf16.msra.mxu0 0
        %851 = vmatprep.subr.bf16.mxu0 0
        %852 = vmatpush1.bf16.msra.mxu0 0
        %853 = vmatprep.subr.bf16.mxu0 0
        %854 = vmatpush1.bf16.msra.mxu0 0
        %855 = vmatprep.subr.bf16.mxu0 0
        %856 = vmatpush1.bf16.msra.mxu0 0
        %857 = vmatprep.subr.bf16.mxu0 0
        %858 = vmatpush1.bf16.msra.mxu0 0
        %859 = vmatprep.subr.bf16.mxu0 0
        %860 = vmatpush1.bf16.msra.mxu0 0
        %861 = vmatprep.subr.bf16.mxu0 0
        %862 = vmatpush1.bf16.msra.mxu0 0
        %863 = vmatprep.subr.bf16.mxu0 %v847
        %864 = vmatpush1.bf16.msra.mxu0 %v844
        %865 = vmatprep.subr.bf16.mxu0 0
        %866 = vmatpush2.bf16.msra.mxu0 0
        %867 = vmatprep.subr.bf16.mxu0 0
        %868 = vmatpush2.bf16.msra.mxu0 0
        %869 = vmatprep.subr.bf16.mxu0 0
        %870 = vmatpush2.bf16.msra.mxu0 0
        %871 = vmatprep.subr.bf16.mxu0 0
        %872 = vmatpush2.bf16.msra.mxu0 0
        %873 = vmatprep.subr.bf16.mxu0 0
        %874 = vmatpush2.bf16.msra.mxu0 0
        %875 = vmatprep.subr.bf16.mxu0 0
        %876 = vmatpush2.bf16.msra.mxu0 0
        %877 = vmatprep.subr.bf16.mxu0 0
        %878 = vmatpush2.bf16.msra.mxu0 0
        %879 = vmatprep.subr.bf16.mxu0 0
        %880 = vmatpush2.bf16.msra.mxu0 0
        %881 = vmatprep.mubr.bf16.mxu0 0
        %882 = vmatmul.mubr.bf16.gmra.mxu0 %v841
        %v883 = vpop.f32.mrf.mxu0
        %v884 = vadd.f32 0.0, %v883
        %v885 = vpop.f32.mrf.mxu0
        %v886 = vadd.f32 0.0, %v885
        %v887 = vpop.f32.mrf.mxu0
        %v888 = vpop.f32.mrf.mxu0
        %889 = vdwg.mxu0
        %v890 = vadd.f32 %v812, %v884
        %v891 = vadd.f32 %v813, %v886
        %892 = vrot.lane.b32.xlu0 %v368, 112
        %v893 = vpop.permute.xlu0 %892
        %894 = vrot.lane.b32.xlu0 %v369, 112
        %v895 = vpop.permute.xlu0 %894
        %vm896 = vcmp.lt.s32.totalorder %v375, 112
        %v897 = vsel %vm896, %v893, %v895
        %v898 = vsel %vm896, %v895, %v893
        %s899 = scalar_lea.vmem %s1, 7
        %v900 = vld [vmem:[%s899] ss:$8 sm:$0x3]
        %v902 = vlaneseq
        %v903 = vshrl.u32 %v902, 7
        %v904 = vsub.s32 0, %v903
        %v905 = vrot.slane %v900, %v904
        %v906 = vlaneseq
        %v907 = vshrl.u32 %v906, 7
        %v908 = vsub.s32 1, %v907
        %v909 = vrot.slane %v900, %v908
        %v912 = vmul.f32 %v897, %v905
        %v913 = vmul.f32 %v898, %v909
        %v914 = vpack.c.bf16 %v912, %v912
        %v915 = vpack.c.bf16 %v913, %v913
        %s916 = scalar_lea.vmem %s2, 28
        %v917 = vld [vmem:[%s916] sm:$0xf]
        %v919 = vsel %vm422, %v917, 0
        %v922 = vsel %vm426, %v914, 0
        %v925 = vsel %vm426, %v915, 0
        %927 = vmatprep.subr.bf16.mxu0 0
        %928 = vmatpush1.bf16.msra.mxu0 0
        %929 = vmatprep.subr.bf16.mxu0 0
        %930 = vmatpush1.bf16.msra.mxu0 0
        %931 = vmatprep.subr.bf16.mxu0 0
        %932 = vmatpush1.bf16.msra.mxu0 0
        %933 = vmatprep.subr.bf16.mxu0 0
        %934 = vmatpush1.bf16.msra.mxu0 0
        %935 = vmatprep.subr.bf16.mxu0 0
        %936 = vmatpush1.bf16.msra.mxu0 0
        %937 = vmatprep.subr.bf16.mxu0 0
        %938 = vmatpush1.bf16.msra.mxu0 0
        %939 = vmatprep.subr.bf16.mxu0 0
        %940 = vmatpush1.bf16.msra.mxu0 0
        %941 = vmatprep.subr.bf16.mxu0 %v925
        %942 = vmatpush1.bf16.msra.mxu0 %v922
        %943 = vmatprep.subr.bf16.mxu0 0
        %944 = vmatpush2.bf16.msra.mxu0 0
        %945 = vmatprep.subr.bf16.mxu0 0
        %946 = vmatpush2.bf16.msra.mxu0 0
        %947 = vmatprep.subr.bf16.mxu0 0
        %948 = vmatpush2.bf16.msra.mxu0 0
        %949 = vmatprep.subr.bf16.mxu0 0
        %950 = vmatpush2.bf16.msra.mxu0 0
        %951 = vmatprep.subr.bf16.mxu0 0
        %952 = vmatpush2.bf16.msra.mxu0 0
        %953 = vmatprep.subr.bf16.mxu0 0
        %954 = vmatpush2.bf16.msra.mxu0 0
        %955 = vmatprep.subr.bf16.mxu0 0
        %956 = vmatpush2.bf16.msra.mxu0 0
        %957 = vmatprep.subr.bf16.mxu0 0
        %958 = vmatpush2.bf16.msra.mxu0 0
        %959 = vmatprep.mubr.bf16.mxu0 0
        %960 = vmatmul.mubr.bf16.gmra.mxu0 %v919
        %v961 = vpop.f32.mrf.mxu0
        %v962 = vadd.f32 0.0, %v961
        %v963 = vpop.f32.mrf.mxu0
        %v964 = vadd.f32 0.0, %v963
        %v965 = vpop.f32.mrf.mxu0
        %v966 = vpop.f32.mrf.mxu0
        %967 = vdwg.mxu0
        %v968 = vadd.f32 %v890, %v962
        %v969 = vadd.f32 %v891, %v964
        %970 = vrot.lane.b32.xlu0 %v368, 111
        %v971 = vpop.permute.xlu0 %970
        %972 = vrot.lane.b32.xlu0 %v369, 111
        %v973 = vpop.permute.xlu0 %972
        %vm974 = vcmp.lt.s32.totalorder %v375, 111
        %v975 = vsel %vm974, %v971, %v973
        %v976 = vsel %vm974, %v973, %v971
        %s977 = scalar_lea.vmem %s1, 16
        %v978 = vld [vmem:[%s977] ss:$8 sm:$0x3]
        %v980 = vlaneseq
        %v981 = vshrl.u32 %v980, 7
        %v982 = vsub.s32 0, %v981
        %v983 = vrot.slane %v978, %v982
        %v984 = vlaneseq
        %v985 = vshrl.u32 %v984, 7
        %v986 = vsub.s32 1, %v985
        %v987 = vrot.slane %v978, %v986
        %v990 = vmul.f32 %v975, %v983
        %v991 = vmul.f32 %v976, %v987
        %v992 = vpack.c.bf16 %v990, %v990
        %v993 = vpack.c.bf16 %v991, %v991
        %s994 = scalar_lea.vmem %s2, 32
        %v995 = vld [vmem:[%s994] sm:$0xf]
        %v997 = vsel %vm422, %v995, 0
        %v1000 = vsel %vm426, %v992, 0
        %v1003 = vsel %vm426, %v993, 0
        %1005 = vmatprep.subr.bf16.mxu0 0
        %1006 = vmatpush1.bf16.msra.mxu0 0
        %1007 = vmatprep.subr.bf16.mxu0 0
        %1008 = vmatpush1.bf16.msra.mxu0 0
        %1009 = vmatprep.subr.bf16.mxu0 0
        %1010 = vmatpush1.bf16.msra.mxu0 0
        %1011 = vmatprep.subr.bf16.mxu0 0
        %1012 = vmatpush1.bf16.msra.mxu0 0
        %1013 = vmatprep.subr.bf16.mxu0 0
        %1014 = vmatpush1.bf16.msra.mxu0 0
        %1015 = vmatprep.subr.bf16.mxu0 0
        %1016 = vmatpush1.bf16.msra.mxu0 0
        %1017 = vmatprep.subr.bf16.mxu0 0
        %1018 = vmatpush1.bf16.msra.mxu0 0
        %1019 = vmatprep.subr.bf16.mxu0 %v1003
        %1020 = vmatpush1.bf16.msra.mxu0 %v1000
        %1021 = vmatprep.subr.bf16.mxu0 0
        %1022 = vmatpush2.bf16.msra.mxu0 0
        %1023 = vmatprep.subr.bf16.mxu0 0
        %1024 = vmatpush2.bf16.msra.mxu0 0
        %1025 = vmatprep.subr.bf16.mxu0 0
        %1026 = vmatpush2.bf16.msra.mxu0 0
        %1027 = vmatprep.subr.bf16.mxu0 0
        %1028 = vmatpush2.bf16.msra.mxu0 0
        %1029 = vmatprep.subr.bf16.mxu0 0
        %1030 = vmatpush2.bf16.msra.mxu0 0
        %1031 = vmatprep.subr.bf16.mxu0 0
        %1032 = vmatpush2.bf16.msra.mxu0 0
        %1033 = vmatprep.subr.bf16.mxu0 0
        %1034 = vmatpush2.bf16.msra.mxu0 0
        %1035 = vmatprep.subr.bf16.mxu0 0
        %1036 = vmatpush2.bf16.msra.mxu0 0
        %1037 = vmatprep.mubr.bf16.mxu0 0
        %1038 = vmatmul.mubr.bf16.gmra.mxu0 %v997
        %v1039 = vpop.f32.mrf.mxu0
        %v1040 = vadd.f32 0.0, %v1039
        %v1041 = vpop.f32.mrf.mxu0
        %v1042 = vadd.f32 0.0, %v1041
        %v1043 = vpop.f32.mrf.mxu0
        %v1044 = vpop.f32.mrf.mxu0
        %1045 = vdwg.mxu0
        %v1046 = vadd.f32 %v968, %v1040
        %v1047 = vadd.f32 %v969, %v1042
        %v1048 = vld [vmem:[%s3] sm:$0xff]
        %1050 = vset.pattern.permute.xlu0 0
        %1051 = vperm.xlu0 %1050, %v1048
        %v1052 = vpop.permute.xlu0 %1051
        %v1054 = vadd.f32 %v1046, %v1052
        %v1055 = vadd.f32 %v1047, %v1052
        %v1056 = vmax.f32 %v1054, 0.0
        %v1057 = vmax.f32 %v1055, 0.0
        %v1058 = vmin.f32 %v1056, 6.0
        %v1059 = vmin.f32 %v1057, 6.0
        %s1060 = scalar_lea.vmem %s4, 32
        %v1061 = vld [vmem:[%s1060] sm:$0xff]
        %1063 = vset.pattern.permute.xlu0 0
        %1064 = vperm.xlu0 %1063, %v1061
        %v1065 = vpop.permute.xlu0 %1064
        %v1067 = vmul.f32 %v1058, %v1065
        %v1068 = vmul.f32 %v1059, %v1065
        %1069 = vrot.lane.b32.xlu0 %v1058, 17
        %v1070 = vpop.permute.xlu0 %1069
        %1071 = vrot.lane.b32.xlu0 %v1059, 17
        %v1072 = vpop.permute.xlu0 %1071
        %v1073 = vsel %vm376, %v1070, %v1072
        %v1074 = vsel %vm376, %v1072, %v1070
        %v1075 = vmul.f32 %v1074, %v384
        %v1076 = vmul.f32 %v1073, %v388
        %v1077 = vld [vmem:[%s4] sm:$0xff]
        %1079 = vset.pattern.permute.xlu0 0
        %1080 = vperm.xlu0 %1079, %v1077
        %v1081 = vpop.permute.xlu0 %1080
        %v1083 = vmul.f32 %v1075, %v1081
        %v1084 = vmul.f32 %v1076, %v1081
        %v1085 = vadd.f32 %v1067, %v1083
        %v1086 = vadd.f32 %v1068, %v1084
        %1087 = vrot.lane.b32.xlu0 %v1058, 16
        %v1088 = vpop.permute.xlu0 %1087
        %1089 = vrot.lane.b32.xlu0 %v1059, 16
        %v1090 = vpop.permute.xlu0 %1089
        %v1091 = vsel %vm400, %v1088, %v1090
        %v1092 = vsel %vm400, %v1090, %v1088
        %v1093 = vmul.f32 %v1092, %v409
        %v1094 = vmul.f32 %v1091, %v413
        %s1095 = scalar_lea.vmem %s4, 8
        %v1096 = vld [vmem:[%s1095] sm:$0xff]
        %1098 = vset.pattern.permute.xlu0 0
        %1099 = vperm.xlu0 %1098, %v1096
        %v1100 = vpop.permute.xlu0 %1099
        %v1102 = vmul.f32 %v1093, %v1100
        %v1103 = vmul.f32 %v1094, %v1100
        %v1104 = vadd.f32 %v1085, %v1102
        %v1105 = vadd.f32 %v1086, %v1103
        %1106 = vrot.lane.b32.xlu0 %v1058, 15
        %v1107 = vpop.permute.xlu0 %1106
        %1108 = vrot.lane.b32.xlu0 %v1059, 15
        %v1109 = vpop.permute.xlu0 %1108
        %v1110 = vsel %vm528, %v1107, %v1109
        %v1111 = vsel %vm528, %v1109, %v1107
        %v1112 = vmul.f32 %v1111, %v537
        %v1113 = vmul.f32 %v1110, %v541
        %s1114 = scalar_lea.vmem %s4, 16
        %v1115 = vld [vmem:[%s1114] sm:$0xff]
        %1117 = vset.pattern.permute.xlu0 0
        %1118 = vperm.xlu0 %1117, %v1115
        %v1119 = vpop.permute.xlu0 %1118
        %v1121 = vmul.f32 %v1112, %v1119
        %v1122 = vmul.f32 %v1113, %v1119
        %v1123 = vadd.f32 %v1104, %v1121
        %v1124 = vadd.f32 %v1105, %v1122
        %1125 = vrot.lane.b32.xlu0 %v1058, 1
        %v1126 = vpop.permute.xlu0 %1125
        %1127 = vrot.lane.b32.xlu0 %v1059, 1
        %v1128 = vpop.permute.xlu0 %1127
        %v1129 = vsel %vm606, %v1126, %v1128
        %v1130 = vsel %vm606, %v1128, %v1126
        %v1131 = vmul.f32 %v1130, %v615
        %v1132 = vmul.f32 %v1129, %v619
        %s1133 = scalar_lea.vmem %s4, 24
        %v1134 = vld [vmem:[%s1133] sm:$0xff]
        %1136 = vset.pattern.permute.xlu0 0
        %1137 = vperm.xlu0 %1136, %v1134
        %v1138 = vpop.permute.xlu0 %1137
        %v1140 = vmul.f32 %v1131, %v1138
        %v1141 = vmul.f32 %v1132, %v1138
        %v1142 = vadd.f32 %v1123, %v1140
        %v1143 = vadd.f32 %v1124, %v1141
        %1144 = vrot.lane.b32.xlu0 %v1058, 127
        %v1145 = vpop.permute.xlu0 %1144
        %1146 = vrot.lane.b32.xlu0 %v1059, 127
        %v1147 = vpop.permute.xlu0 %1146
        %v1148 = vsel %vm740, %v1145, %v1147
        %v1149 = vsel %vm740, %v1147, %v1145
        %v1150 = vmul.f32 %v1148, %v749
        %v1151 = vmul.f32 %v1149, %v753
        %s1152 = scalar_lea.vmem %s4, 40
        %v1153 = vld [vmem:[%s1152] sm:$0xff]
        %1155 = vset.pattern.permute.xlu0 0
        %1156 = vperm.xlu0 %1155, %v1153
        %v1157 = vpop.permute.xlu0 %1156
        %v1159 = vmul.f32 %v1150, %v1157
        %v1160 = vmul.f32 %v1151, %v1157
        %v1161 = vadd.f32 %v1142, %v1159
        %v1162 = vadd.f32 %v1143, %v1160
        %1163 = vrot.lane.b32.xlu0 %v1058, 113
        %v1164 = vpop.permute.xlu0 %1163
        %1165 = vrot.lane.b32.xlu0 %v1059, 113
        %v1166 = vpop.permute.xlu0 %1165
        %v1167 = vsel %vm818, %v1164, %v1166
        %v1168 = vsel %vm818, %v1166, %v1164
        %v1169 = vmul.f32 %v1167, %v827
        %v1170 = vmul.f32 %v1168, %v831
        %s1171 = scalar_lea.vmem %s4, 48
        %v1172 = vld [vmem:[%s1171] sm:$0xff]
        %1174 = vset.pattern.permute.xlu0 0
        %1175 = vperm.xlu0 %1174, %v1172
        %v1176 = vpop.permute.xlu0 %1175
        %v1178 = vmul.f32 %v1169, %v1176
        %v1179 = vmul.f32 %v1170, %v1176
        %v1180 = vadd.f32 %v1161, %v1178
        %v1181 = vadd.f32 %v1162, %v1179
        %1182 = vrot.lane.b32.xlu0 %v1058, 112
        %v1183 = vpop.permute.xlu0 %1182
        %1184 = vrot.lane.b32.xlu0 %v1059, 112
        %v1185 = vpop.permute.xlu0 %1184
        %v1186 = vsel %vm896, %v1183, %v1185
        %v1187 = vsel %vm896, %v1185, %v1183
        %v1188 = vmul.f32 %v1186, %v905
        %v1189 = vmul.f32 %v1187, %v909
        %s1190 = scalar_lea.vmem %s4, 56
        %v1191 = vld [vmem:[%s1190] sm:$0xff]
        %1193 = vset.pattern.permute.xlu0 0
        %1194 = vperm.xlu0 %1193, %v1191
        %v1195 = vpop.permute.xlu0 %1194
        %v1197 = vmul.f32 %v1188, %v1195
        %v1198 = vmul.f32 %v1189, %v1195
        %v1199 = vadd.f32 %v1180, %v1197
        %v1200 = vadd.f32 %v1181, %v1198
        %1201 = vrot.lane.b32.xlu0 %v1058, 111
        %v1202 = vpop.permute.xlu0 %1201
        %1203 = vrot.lane.b32.xlu0 %v1059, 111
        %v1204 = vpop.permute.xlu0 %1203
        %v1205 = vsel %vm974, %v1202, %v1204
        %v1206 = vsel %vm974, %v1204, %v1202
        %v1207 = vmul.f32 %v1205, %v983
        %v1208 = vmul.f32 %v1206, %v987
        %s1209 = scalar_lea.vmem %s4, 64
        %v1210 = vld [vmem:[%s1209] sm:$0xff]
        %1212 = vset.pattern.permute.xlu0 0
        %1213 = vperm.xlu0 %1212, %v1210
        %v1214 = vpop.permute.xlu0 %1213
        %v1216 = vmul.f32 %v1207, %v1214
        %v1217 = vmul.f32 %v1208, %v1214
        %v1218 = vadd.f32 %v1199, %v1216
        %v1219 = vadd.f32 %v1200, %v1217
        %v1220 = vld [vmem:[%s5] sm:$0xff]
        %1222 = vset.pattern.permute.xlu0 0
        %1223 = vperm.xlu0 %1222, %v1220
        %v1224 = vpop.permute.xlu0 %1223
        %v1226 = vadd.f32 %v1218, %v1224
        %v1227 = vadd.f32 %v1219, %v1224
        %v1228 = vmax.f32 %v1226, 0.0
        %v1229 = vmax.f32 %v1227, 0.0
        %v1230 = vmin.f32 %v1228, 6.0
        %v1231 = vmin.f32 %v1229, 6.0
        %v1232 = vld [vmem:[%s6] sm:$0xf]
        %v1233 = vld [vmem:[%s6 + $0x4] sm:$0xf]
        %v1234 = vpack.c.bf16 %v1230, %v1230
        %v1235 = vpack.c.bf16 %v1231, %v1231
        %v1236 = vld [vmem:[%s7] sm:$0xff]
        %v1237 = vld [vmem:[%s7 + $0x8] sm:$0xff]
        %1239 = vset.pattern.permute.xlu0 0
        %1240 = vperm.xlu0 %1239, %v1236
        %v1241 = vpop.permute.xlu0 %1240
        %1244 = vset.pattern.permute.xlu0 0
        %1245 = vperm.xlu0 %1244, %v1237
        %v1246 = vpop.permute.xlu0 %1245
        %v1250 = vunpack.c.l.b16 %v1232
        %v1251 = vunpack.c.l.b16 %v1233
        %v1252 = vpack.c.b16 %v1251, %v1250
        %v1254 = vsel %vm422, %v1252, 0
        %v1257 = vsel %vm426, %v1234, 0
        %v1260 = vsel %vm426, %v1235, 0
        %1262 = vmatprep.subr.bf16.mxu0 0
        %1263 = vmatpush1.bf16.msra.mxu0 0
        %1264 = vmatprep.subr.bf16.mxu0 0
        %1265 = vmatpush1.bf16.msra.mxu0 0
        %1266 = vmatprep.subr.bf16.mxu0 0
        %1267 = vmatpush1.bf16.msra.mxu0 0
        %1268 = vmatprep.subr.bf16.mxu0 0
        %1269 = vmatpush1.bf16.msra.mxu0 0
        %1270 = vmatprep.subr.bf16.mxu0 0
        %1271 = vmatpush1.bf16.msra.mxu0 0
        %1272 = vmatprep.subr.bf16.mxu0 0
        %1273 = vmatpush1.bf16.msra.mxu0 0
        %1274 = vmatprep.subr.bf16.mxu0 0
        %1275 = vmatpush1.bf16.msra.mxu0 0
        %1276 = vmatprep.subr.bf16.mxu0 %v1260
        %1277 = vmatpush1.bf16.msra.mxu0 %v1257
        %1278 = vmatprep.subr.bf16.mxu0 0
        %1279 = vmatpush2.bf16.msra.mxu0 0
        %1280 = vmatprep.subr.bf16.mxu0 0
        %1281 = vmatpush2.bf16.msra.mxu0 0
        %1282 = vmatprep.subr.bf16.mxu0 0
        %1283 = vmatpush2.bf16.msra.mxu0 0
        %1284 = vmatprep.subr.bf16.mxu0 0
        %1285 = vmatpush2.bf16.msra.mxu0 0
        %1286 = vmatprep.subr.bf16.mxu0 0
        %1287 = vmatpush2.bf16.msra.mxu0 0
        %1288 = vmatprep.subr.bf16.mxu0 0
        %1289 = vmatpush2.bf16.msra.mxu0 0
        %1290 = vmatprep.subr.bf16.mxu0 0
        %1291 = vmatpush2.bf16.msra.mxu0 0
        %1292 = vmatprep.subr.bf16.mxu0 0
        %1293 = vmatpush2.bf16.msra.mxu0 0
        %1294 = vmatprep.mubr.bf16.mxu0 0
        %1295 = vmatmul.mubr.bf16.gmra.mxu0 %v1254
        %v1296 = vpop.f32.mrf.mxu0
        %v1297 = vadd.f32 %v1241, %v1296
        %v1298 = vpop.f32.mrf.mxu0
        %v1299 = vadd.f32 %v1241, %v1298
        %v1300 = vpop.f32.mrf.mxu0
        %v1301 = vadd.f32 %v1246, %v1300
        %v1302 = vpop.f32.mrf.mxu0
        %v1303 = vadd.f32 %v1246, %v1302
        %1304 = vdwg.mxu0
        %v1305 = vmax.f32 %v1297, 0.0
        %v1306 = vmax.f32 %v1299, 0.0
        %v1307 = vmax.f32 %v1301, 0.0
        %v1308 = vmax.f32 %v1303, 0.0
        %v1309 = vmin.f32 %v1305, 6.0
        %v1310 = vmin.f32 %v1306, 6.0
        %v1311 = vmin.f32 %v1307, 6.0
        %v1312 = vmin.f32 %v1308, 6.0
        %v1313 = vld [vmem:[%s8] sm:$0xff]
        %v1314 = vld [vmem:[%s8 + $0x8] sm:$0xff]
        %v1315 = vld [vmem:[%s9] sm:$0x1]
        %v1316 = vadd.f32 %v1309, %v1310
        %1317 = vadd.xlane.f32.xlu0 %v1316
        %v1318 = vpop.xlane.xlu0 %1317
        %v1319 = vadd.f32 %v1311, %v1312
        %1320 = vadd.xlane.f32.xlu0 %v1319
        %v1321 = vpop.xlane.xlu0 %1320
        %v1322 = vmul.f32 %v1318, 0.00390625
        %v1323 = vmul.f32 %v1321, 0.00390625
        %v1324 = vmul.f32 %v1322, %v1313
        %v1325 = vmul.f32 %v1323, %v1314
        %v1326 = vadd.f32 %v1324, %v1325
        %v1327 = vrot.slane %v1326, 4
        %v1328 = vadd.f32 %v1326, %v1327
        %v1329 = vrot.slane %v1328, 2
        %v1330 = vadd.f32 %v1328, %v1329
        %v1331 = vrot.slane %v1330, 1
        %v1332 = vadd.f32 %v1330, %v1331
        %v1333 = vadd.f32 %v1332, %v1315
        %1334 = vst [vmem:[%s351] sm:$0x1] %v1333
        %s1335 = sand.u32 %s247, 1
        %s1336 = scalar_lea.sflag [#allocation3], %s1335
        %s1337 = sand.u32 %s247, 1
        %s1338 = scalar_lea.vmem [#allocation2], %s1337
        // Predicated region
        $region61: #{tpu_custom_call.1} parent=59 // pred_check
          %p1339 = pneg %p257
        $region62: #{tpu_custom_call.1} parent=59 // pred_check_branch
          %1341 = sbr.rel (%p1339) target = $region64
        $region63: #{tpu_custom_call.1} parent=59 // pred_region
          %s1343 = ssub.s32 16, 16
          %1344 = vsyncadd %s1336, %s1343
          %s1345 = smul.addr %s24, 16
          %s1346 = scalar_lea.hbm %s10, %s1345
          %s1348 = sshll.u32 %s1338, 4
          %s1349 = int_to_ptr.vmem [resolvable:$true] %s1348
          %1351 = dma.vmem_to_hbm [thread:$0]  %s1349, 16, %s1346, %s1336
        $region64: #{tpu_custom_call.1} parent=59 // pred_fallthru
          _
      $region60: #{tpu_custom_call.1} parent=5 // pred_fallthru
        _
      %p1352 = scmp.le.s32.totalorder 2, %s19
      // Predicated region
      $region65: #{tpu_custom_call.1} parent=5 // pred_check
        %p1353 = pneg %p1352
      $region66: #{tpu_custom_call.1} parent=5 // pred_check_branch
        %1355 = sbr.rel (%p1353) target = $region68
      $region67: #{tpu_custom_call.1} parent=5 // pred_region
        %s1356 = ssub.s32 %s19, 2
        // Predicated region
        $region69: #{tpu_custom_call.1} parent=67 // pred_check
          %p1357 = pneg %p263
        $region70: #{tpu_custom_call.1} parent=67 // pred_check_branch
          %1359 = sbr.rel (%p1357) target = $region72
        $region71: #{tpu_custom_call.1} parent=67 // pred_region
          %s1360 = sand.u32 %s248, 1
          %s1361 = scalar_lea.sflag [#allocation3], %s1360
          %s1362 = sand.u32 %s248, 1
          %s1363 = scalar_lea.vmem [#allocation2], %s1362
          %1364 = dma.done %s1361, 16
        $region72: #{tpu_custom_call.1} parent=67 // pred_fallthru
          _
      $region68: #{tpu_custom_call.1} parent=5 // pred_fallthru
        _
    $region6: #{tpu_custom_call.1} parent=1 // loop_footer
      %s23 = sadd.s32 1, %s19
    $region7: #{tpu_custom_call.1} parent=1 // loop_footer_branch
      %18 = sbr.rel target = $region3
    $region8: #{tpu_custom_call.1} parent=1 // loop_exit
      _
    %1365 = vsyncpa [#allocation3], 1
    %s1366 = scalar_lea.sflag [#allocation3], 1
    %1367 = vsyncpa %s1366, 1

</llo_original>
